<compile_context>
chip_gen: v6e
topology: v6e:2x2x1
jax: 0.10.0
libtpu: 0.0.40
codegen_flags: <defaults>
</compile_context>

<pallas_src>
import functools

import jax
import jax.numpy as jnp
from jax.experimental import pallas as pl
from jax.experimental.pallas import tpu as pltpu


def _round_up(x, m):
    return (x + m - 1) // m * m


# ----------------------------- Pallas kernel ------------------------------ #

def _sym_conv3d_kernel(x_ref, w_ref, o_ref, acc_ref, lhs_ref, *,
                       kh, kw, wp, cin, n_rows, row_tile, groups,
                       rows_per_group, o4):
    """One (n, do, dz) grid step.

    x_ref  : (rows_ext, C)           channels-last padded plane at depth do*sd+dz
    w_ref  : (kd, kh*kw*C, O4)       full folded weight, resident across the grid
    o_ref  : (rows_per_group, G*O4)  lane-packed output rows for this (n, do)
    acc_ref: (n_rows, O4) f32        accumulator across the dz reduction axis
    lhs_ref: (row_tile, kh*kw*C)     per-tile im2col scratch (VMEM only)
    """
    dz = pl.program_id(2)

    @pl.when(dz == 0)
    def _init():
        acc_ref[...] = jnp.zeros_like(acc_ref)

    w = w_ref[dz]                                        # (kh*kw*C, O4)

    n_tiles = (n_rows + row_tile - 1) // row_tile
    for t in range(n_tiles):
        r0 = t * row_tile
        rt = min(row_tile, n_rows - r0)
        # Fold the kh*kw taps into the contraction dim: each tap is a static
        # shifted-row window of the flattened plane, copied into its K-slice of
        # the VMEM im2col scratch; then one MXU dot with K = kh*kw*C.
        for dy in range(kh):
            for dx in range(kw):
                tap = dy * kw + dx
                off = dy * wp + dx
                lhs_ref[:rt, tap * cin:(tap + 1) * cin] = (
                    x_ref[r0 + off:r0 + off + rt, :])
        acc_ref[r0:r0 + rt, :] += jnp.dot(
            lhs_ref[:rt, :], w, preferred_element_type=jnp.float32)

    @pl.when(dz == pl.num_programs(2) - 1)
    def _write():
        # Pack G row-groups into the 128-wide lane dim of the output block:
        # dense writeback in out_dtype, no zero-padded output channels.
        for g in range(groups):
            o_ref[:, g * o4:(g + 1) * o4] = (
                acc_ref[g * rows_per_group:(g + 1) * rows_per_group, :]
                .astype(o_ref.dtype))


# ------------------------------ JAX wrapper -------------------------------- #

def _symmetric_weight(weight, weight_norm):
    """4 rot90 copies in the (kH, kW) plane concatenated on out-channels."""
    w_full = jnp.concatenate(
        [jnp.rot90(weight, r, axes=(3, 4)) for r in range(4)], axis=0)
    if weight_norm:
        # Faithful to the PyTorch module: sums over dims 1,2,3 only (kW axis is
        # NOT summed) and no epsilon is added.
        denom = jnp.sqrt(jnp.sum(w_full ** 2, axis=(1, 2, 3), keepdims=True))
        w_full = w_full / denom
    return w_full


def init_symmetric_conv3d_weight(key, in_channels, out_channels, kernel_size,
                                 dtype=jnp.float32):
    """Matches the PyTorch init: 2*sqrt(k)*(U[0,1) - 0.5)."""
    kd, kh, kw = kernel_size
    k = 1.0 / (in_channels * kd * kh * kw)
    u = jax.random.uniform(key, (out_channels, in_channels, kd, kh, kw),
                           dtype=dtype)
    return 2.0 * jnp.sqrt(k) * (u - 0.5)


def _pick_vmem_limit(need_bytes):
    """Per-generation VMEM budget: cap at 75% of physical (64 MiB on v7x)."""
    try:
        kind = jax.devices()[0].device_kind.lower()
    except Exception:  # pragma: no cover - defensive
        kind = ""
    phys = (64 << 20) if "v7" in kind else (128 << 20)
    cap = int(phys * 0.75)
    return int(min(max(need_bytes, 32 << 20), cap))


def symmetric_conv3d(x, weight, stride, padding, weight_norm=False,
                     compute_dtype=jnp.bfloat16, out_dtype=None, row_tile=1024):
    """Forward pass of SymmetricConv3d.

    x:      (N, Cin, D, H, W)
    weight: (Cout, Cin, kT, kH, kW)
    returns (N, 4*Cout, Do, Ho, Wo)   (same layout as the PyTorch module)
    """
    N, C, D, H, W = x.shape
    O, Cw, kd, kh, kw = weight.shape
    assert C == Cw
    sd, sh, sw = stride
    pd, ph, pw = padding
    out_dtype = out_dtype or x.dtype

    Dp, Hp, Wp = D + 2 * pd, H + 2 * ph, W + 2 * pw
    Do = (Dp - kd) // sd + 1
    Ho = (Hp - kh) // sh + 1
    Wo = (Wp - kw) // sw + 1

    O4 = 4 * O
    K = kh * kw * C

    # Lane packing: when 4*Cout < 128, pack G independent row-groups into the
    # 128-lane output block instead of zero-padding the channel dim.
    G = max(1, 128 // O4) if O4 < 128 else 1
    NR = _round_up(Hp * Wp, 8 * G)            # dense rows computed per (n, do)
    NRG = NR // G
    rows_ext = _round_up(NR + (kh - 1) * Wp + (kw - 1), 8)   # zero tail for taps
    row_tile = max(8, min(_round_up(row_tile, 8), NR))

    # Folded weight: (kd, kh*kw*C, 4*Cout), K index = (dy*kw + dx)*C + c.
    w_full = _symmetric_weight(weight, weight_norm)            # (O4, C, kd, kh, kw)
    wm = jnp.transpose(w_full, (2, 3, 4, 1, 0)).reshape(kd, K, O4)
    wm = wm.astype(compute_dtype)

    # Channels-last padded input, one flattened (Hp*Wp, C) plane per (n, depth),
    # with a zero tail so shifted-row taps never read out of bounds.
    xp = jnp.pad(x, ((0, 0), (0, 0), (pd, pd), (ph, ph), (pw, pw)))
    planes = jnp.transpose(xp, (0, 2, 3, 4, 1)).reshape(N, Dp, Hp * Wp, C)
    planes = jnp.pad(planes, ((0, 0), (0, 0), (0, rows_ext - Hp * Wp), (0, 0)))
    planes = planes.astype(compute_dtype)

    kernel = functools.partial(
        _sym_conv3d_kernel, kh=kh, kw=kw, wp=Wp, cin=C, n_rows=NR,
        row_tile=row_tile, groups=G, rows_per_group=NRG, o4=O4)

    bc = jnp.dtype(compute_dtype).itemsize
    bo = jnp.dtype(out_dtype).itemsize
    need = (2 * rows_ext * C * bc            # double-buffered input plane
            + 2 * kd * K * O4 * bc           # resident folded weight
            + 2 * NRG * G * O4 * bo          # double-buffered output block
            + NR * O4 * 4                    # f32 accumulator
            + row_tile * K * bc              # im2col scratch
            + row_tile * O4 * 4)             # dot result temp
    vmem_limit = _pick_vmem_limit(int(need * 1.5) + (4 << 20))

    out = pl.pallas_call(
        kernel,
        out_shape=jax.ShapeDtypeStruct((N, Do, NRG, G * O4), out_dtype),
        grid_spec=pltpu.PrefetchScalarGridSpec(
            num_scalar_prefetch=0,
            grid=(N, Do, kd),
            in_specs=[
                # One padded depth plane per (n, do, dz); squeezed leading dims.
                pl.BlockSpec((None, None, rows_ext, C),
                             lambda n, do, dz: (n, do * sd + dz, 0, 0)),
                # Whole folded weight, resident (constant index_map).
                pl.BlockSpec((kd, K, O4), lambda n, do, dz: (0, 0, 0)),
            ],
            out_specs=pl.BlockSpec((None, None, NRG, G * O4),
                                   lambda n, do, dz: (n, do, 0, 0)),
            scratch_shapes=[
                pltpu.VMEM((NR, O4), jnp.float32),        # dz accumulator
                pltpu.VMEM((row_tile, K), compute_dtype),  # im2col LHS tile
            ],
        ),
        compiler_params=pltpu.CompilerParams(
            dimension_semantics=("parallel", "parallel", "arbitrary"),
            vmem_limit_bytes=vmem_limit,
        ),
    )(planes, wm)

    # Single fused post-pass: unpack the lane groups, drop padded rows, apply
    # the H/W stride, and transpose back to the module's NCDHW layout.
    out = out.reshape(N, Do, NRG, G, O4)
    out = jnp.transpose(out, (0, 1, 3, 2, 4)).reshape(N, Do, NR, O4)
    out = out[:, :, :Hp * Wp, :].reshape(N, Do, Hp, Wp, O4)
    out = out[:, :, :(Ho - 1) * sh + 1:sh, :(Wo - 1) * sw + 1:sw, :]
    out = jnp.transpose(out, (0, 4, 1, 2, 3)).astype(out_dtype)
    return out


# ------------------------------ self-test ---------------------------------- #

if __name__ == "__main__":
    key = jax.random.PRNGKey(0)
    kx, kw_key, kw2_key = jax.random.split(key, 3)

    # Small shapes consistent with the module.
    N, Cin, Cout = 2, 4, 4
    D, H, W = 4, 8, 8
    kernel_size = (3, 3, 3)
    stride = (1, 1, 1)
    padding = (1, 1, 1)
    pads = [(p, p) for p in padding]
    dn = ("NCDHW", "OIDHW", "NCDHW")

    x = jax.random.normal(kx, (N, Cin, D, H, W), dtype=jnp.float32)
    weight = init_symmetric_conv3d_weight(kw_key, Cin, Cout, kernel_size)
    w_full = _symmetric_weight(weight, weight_norm=False)

    # --- default (bf16 compute, f32 accumulate) path, under jit -------------
    fwd = jax.jit(functools.partial(symmetric_conv3d, stride=stride,
                                    padding=padding, weight_norm=False))
    out = jax.block_until_ready(fwd(x, weight))
    assert out.shape == (N, 4 * Cout, D, H, W), out.shape

    ref_bf16 = jax.lax.conv_general_dilated(
        x.astype(jnp.bfloat16), w_full.astype(jnp.bfloat16),
        window_strides=stride, padding=pads, dimension_numbers=dn,
        preferred_element_type=jnp.float32)
    ref_bf16 = jax.block_until_ready(ref_bf16)
    assert jnp.allclose(out, ref_bf16, atol=2e-3, rtol=2e-3), (
        float(jnp.max(jnp.abs(out - ref_bf16))))

    # --- full f32 path vs f32 XLA conv --------------------------------------
    out_f32 = symmetric_conv3d(x, weight, stride, padding, weight_norm=False,
                               compute_dtype=jnp.float32)
    ref_f32 = jax.lax.conv_general_dilated(
        x, w_full, window_strides=stride, padding=pads, dimension_numbers=dn)
    out_f32, ref_f32 = jax.block_until_ready((out_f32, ref_f32))
    assert jnp.allclose(out_f32, ref_f32, atol=2e-3, rtol=2e-3), (
        float(jnp.max(jnp.abs(out_f32 - ref_f32))))

    # --- multi-tile + ragged-tile in-kernel row tiling (row_tile=48) ---------
    out_rt = symmetric_conv3d(x, weight, stride, padding, weight_norm=False,
                              compute_dtype=jnp.float32, row_tile=48)
    out_rt = jax.block_until_ready(out_rt)
    assert jnp.allclose(out_rt, ref_f32, atol=2e-3, rtol=2e-3), (
        float(jnp.max(jnp.abs(out_rt - ref_f32))))

    # --- weight_norm=True path ----------------------------------------------
    out_wn = symmetric_conv3d(x, weight, stride, padding, weight_norm=True,
                              compute_dtype=jnp.float32)
    w_full_n = _symmetric_weight(weight, weight_norm=True)
    ref_wn = jax.lax.conv_general_dilated(
        x, w_full_n, window_strides=stride, padding=pads, dimension_numbers=dn)
    out_wn, ref_wn = jax.block_until_ready((out_wn, ref_wn))
    assert jnp.allclose(out_wn, ref_wn, atol=2e-3, rtol=2e-3), (
        float(jnp.max(jnp.abs(out_wn - ref_wn))))

    # --- stride > 1 in H/W (post-pass subsampling) ---------------------------
    stride2 = (1, 2, 2)
    out_s2 = symmetric_conv3d(x, weight, stride2, padding, weight_norm=False,
                              compute_dtype=jnp.float32)
    ref_s2 = jax.lax.conv_general_dilated(
        x, w_full, window_strides=stride2, padding=pads, dimension_numbers=dn)
    out_s2, ref_s2 = jax.block_until_ready((out_s2, ref_s2))
    assert out_s2.shape == ref_s2.shape, (out_s2.shape, ref_s2.shape)
    assert jnp.allclose(out_s2, ref_s2, atol=2e-3, rtol=2e-3), (
        float(jnp.max(jnp.abs(out_s2 - ref_s2))))

    # --- wide-output path (4*Cout = 128 -> G = 1, full-lane block) -----------
    weight_w = init_symmetric_conv3d_weight(kw2_key, Cin, 32, kernel_size)
    w_full_w = _symmetric_weight(weight_w, weight_norm=False)
    out_w = symmetric_conv3d(x, weight_w, stride, padding, weight_norm=False,
                             compute_dtype=jnp.float32)
    ref_w = jax.lax.conv_general_dilated(
        x, w_full_w, window_strides=stride, padding=pads, dimension_numbers=dn)
    out_w, ref_w = jax.block_until_ready((out_w, ref_w))
    assert jnp.allclose(out_w, ref_w, atol=2e-3, rtol=2e-3), (
        float(jnp.max(jnp.abs(out_w - ref_w))))

    print("KERNEL_OK")
</pallas_src>

<mosaic_0001>
module attributes {stable_mosaic.version = 11 : i64} {
  func.func @_sym_conv3d_kernel(%arg0: i32, %arg1: i32, %arg2: i32, %arg3: memref<1x1x152x4xbf16, #tpu.memory_space<vmem>>, %arg4: memref<3x36x16xbf16, #tpu.memory_space<vmem>>, %arg5: memref<1x1x16x128xf32, #tpu.memory_space<vmem>>, %arg6: memref<128x16xf32, #tpu.memory_space<vmem>>, %arg7: memref<128x36xbf16, #tpu.memory_space<vmem>>) attributes {dimension_semantics = [#tpu.dimension_semantics<parallel>, #tpu.dimension_semantics<parallel>, #tpu.dimension_semantics<arbitrary>], iteration_bounds = array<i64: 2, 4, 3>, scalar_prefetch = 0 : i64, scratch_operands = 2 : i64, tpu.core_type = #tpu.core_type<tc>, window_params = [{transform_indices = @transform_0, window_bounds = array<i64: 1, 1, 152, 4>}, {pipeline_mode = #tpu.pipeline_mode<synchronous>, transform_indices = @transform_1, window_bounds = array<i64: 3, 36, 16>}, {transform_indices = @transform_2, window_bounds = array<i64: 1, 1, 16, 128>}]} {
    %c0_i32 = arith.constant 0 : i32
    %0 = arith.cmpi eq, %arg2, %c0_i32 : i32
    %1 = arith.extui %0 : i1 to i32
    %c0_i32_0 = arith.constant 0 : i32
    %2 = arith.cmpi ne, %1, %c0_i32_0 : i32
    scf.if %2 {
      %cst_49 = arith.constant 0.000000e+00 : f32
      %41 = vector.broadcast %cst_49 : f32 to vector<128x16xf32>
      %c0_50 = arith.constant 0 : index
      %c0_51 = arith.constant 0 : index
      %42 = vector.load %arg6[%c0_50, %c0_51] : memref<128x16xf32, #tpu.memory_space<vmem>>, vector<128x16xf32>
      tpu.vector_store %arg6[%c0_50, %c0_51], %41 {strides = array<i32>} : memref<128x16xf32, #tpu.memory_space<vmem>>, vector<128x16xf32>,
    } else {
    }
    %3 = arith.index_cast %arg2 : i32 to index
    %c0 = arith.constant 0 : index
    %c0_1 = arith.constant 0 : index
    %4 = vector.load %arg4[%3, %c0, %c0_1] : memref<3x36x16xbf16, #tpu.memory_space<vmem>>, vector<1x36x16xbf16>
    %5 = vector.shape_cast %4 : vector<1x36x16xbf16> to vector<36x16xbf16>
    %c0_2 = arith.constant 0 : index
    %c0_3 = arith.constant 0 : index
    %c0_4 = arith.constant 0 : index
    %c0_5 = arith.constant 0 : index
    %6 = vector.load %arg3[%c0_2, %c0_3, %c0_4, %c0_5] : memref<1x1x152x4xbf16, #tpu.memory_space<vmem>>, vector<1x1x128x4xbf16>
    %7 = vector.shape_cast %6 : vector<1x1x128x4xbf16> to vector<128x4xbf16>
    %c0_6 = arith.constant 0 : index
    %c0_7 = arith.constant 0 : index
    %8 = vector.load %arg7[%c0_6, %c0_7] : memref<128x36xbf16, #tpu.memory_space<vmem>>, vector<128x4xbf16>
    tpu.vector_store %arg7[%c0_6, %c0_7], %7 {strides = array<i32>} : memref<128x36xbf16, #tpu.memory_space<vmem>>, vector<128x4xbf16>,
    %c0_8 = arith.constant 0 : index
    %c0_9 = arith.constant 0 : index
    %c1 = arith.constant 1 : index
    %c0_10 = arith.constant 0 : index
    %9 = vector.load %arg3[%c0_8, %c0_9, %c1, %c0_10] : memref<1x1x152x4xbf16, #tpu.memory_space<vmem>>, vector<1x1x128x4xbf16>
    %10 = vector.shape_cast %9 : vector<1x1x128x4xbf16> to vector<128x4xbf16>
    %c0_11 = arith.constant 0 : index
    %c4 = arith.constant 4 : index
    %11 = vector.load %arg7[%c0_11, %c4] : memref<128x36xbf16, #tpu.memory_space<vmem>>, vector<128x4xbf16>
    tpu.vector_store %arg7[%c0_11, %c4], %10 {strides = array<i32>} : memref<128x36xbf16, #tpu.memory_space<vmem>>, vector<128x4xbf16>,
    %c0_12 = arith.constant 0 : index
    %c0_13 = arith.constant 0 : index
    %c2 = arith.constant 2 : index
    %c0_14 = arith.constant 0 : index
    %12 = vector.load %arg3[%c0_12, %c0_13, %c2, %c0_14] : memref<1x1x152x4xbf16, #tpu.memory_space<vmem>>, vector<1x1x128x4xbf16>
    %13 = vector.shape_cast %12 : vector<1x1x128x4xbf16> to vector<128x4xbf16>
    %c0_15 = arith.constant 0 : index
    %c8 = arith.constant 8 : index
    %14 = vector.load %arg7[%c0_15, %c8] : memref<128x36xbf16, #tpu.memory_space<vmem>>, vector<128x4xbf16>
    tpu.vector_store %arg7[%c0_15, %c8], %13 {strides = array<i32>} : memref<128x36xbf16, #tpu.memory_space<vmem>>, vector<128x4xbf16>,
    %c0_16 = arith.constant 0 : index
    %c0_17 = arith.constant 0 : index
    %c10 = arith.constant 10 : index
    %c0_18 = arith.constant 0 : index
    %15 = vector.load %arg3[%c0_16, %c0_17, %c10, %c0_18] : memref<1x1x152x4xbf16, #tpu.memory_space<vmem>>, vector<1x1x128x4xbf16>
    %16 = vector.shape_cast %15 : vector<1x1x128x4xbf16> to vector<128x4xbf16>
    %c0_19 = arith.constant 0 : index
    %c12 = arith.constant 12 : index
    %17 = vector.load %arg7[%c0_19, %c12] : memref<128x36xbf16, #tpu.memory_space<vmem>>, vector<128x4xbf16>
    tpu.vector_store %arg7[%c0_19, %c12], %16 {strides = array<i32>} : memref<128x36xbf16, #tpu.memory_space<vmem>>, vector<128x4xbf16>,
    %c0_20 = arith.constant 0 : index
    %c0_21 = arith.constant 0 : index
    %c11 = arith.constant 11 : index
    %c0_22 = arith.constant 0 : index
    %18 = vector.load %arg3[%c0_20, %c0_21, %c11, %c0_22] : memref<1x1x152x4xbf16, #tpu.memory_space<vmem>>, vector<1x1x128x4xbf16>
    %19 = vector.shape_cast %18 : vector<1x1x128x4xbf16> to vector<128x4xbf16>
    %c0_23 = arith.constant 0 : index
    %c16 = arith.constant 16 : index
    %20 = vector.load %arg7[%c0_23, %c16] : memref<128x36xbf16, #tpu.memory_space<vmem>>, vector<128x4xbf16>
    tpu.vector_store %arg7[%c0_23, %c16], %19 {strides = array<i32>} : memref<128x36xbf16, #tpu.memory_space<vmem>>, vector<128x4xbf16>,
    %c0_24 = arith.constant 0 : index
    %c0_25 = arith.constant 0 : index
    %c12_26 = arith.constant 12 : index
    %c0_27 = arith.constant 0 : index
    %21 = vector.load %arg3[%c0_24, %c0_25, %c12_26, %c0_27] : memref<1x1x152x4xbf16, #tpu.memory_space<vmem>>, vector<1x1x128x4xbf16>
    %22 = vector.shape_cast %21 : vector<1x1x128x4xbf16> to vector<128x4xbf16>
    %c0_28 = arith.constant 0 : index
    %c20 = arith.constant 20 : index
    %23 = vector.load %arg7[%c0_28, %c20] : memref<128x36xbf16, #tpu.memory_space<vmem>>, vector<128x4xbf16>
    tpu.vector_store %arg7[%c0_28, %c20], %22 {strides = array<i32>} : memref<128x36xbf16, #tpu.memory_space<vmem>>, vector<128x4xbf16>,
    %c0_29 = arith.constant 0 : index
    %c0_30 = arith.constant 0 : index
    %c20_31 = arith.constant 20 : index
    %c0_32 = arith.constant 0 : index
    %24 = vector.load %arg3[%c0_29, %c0_30, %c20_31, %c0_32] : memref<1x1x152x4xbf16, #tpu.memory_space<vmem>>, vector<1x1x128x4xbf16>
    %25 = vector.shape_cast %24 : vector<1x1x128x4xbf16> to vector<128x4xbf16>
    %c0_33 = arith.constant 0 : index
    %c24 = arith.constant 24 : index
    %26 = vector.load %arg7[%c0_33, %c24] : memref<128x36xbf16, #tpu.memory_space<vmem>>, vector<128x4xbf16>
    tpu.vector_store %arg7[%c0_33, %c24], %25 {strides = array<i32>} : memref<128x36xbf16, #tpu.memory_space<vmem>>, vector<128x4xbf16>,
    %c0_34 = arith.constant 0 : index
    %c0_35 = arith.constant 0 : index
    %c21 = arith.constant 21 : index
    %c0_36 = arith.constant 0 : index
    %27 = vector.load %arg3[%c0_34, %c0_35, %c21, %c0_36] : memref<1x1x152x4xbf16, #tpu.memory_space<vmem>>, vector<1x1x128x4xbf16>
    %28 = vector.shape_cast %27 : vector<1x1x128x4xbf16> to vector<128x4xbf16>
    %c0_37 = arith.constant 0 : index
    %c28 = arith.constant 28 : index
    %29 = vector.load %arg7[%c0_37, %c28] : memref<128x36xbf16, #tpu.memory_space<vmem>>, vector<128x4xbf16>
    tpu.vector_store %arg7[%c0_37, %c28], %28 {strides = array<i32>} : memref<128x36xbf16, #tpu.memory_space<vmem>>, vector<128x4xbf16>,
    %c0_38 = arith.constant 0 : index
    %c0_39 = arith.constant 0 : index
    %c22 = arith.constant 22 : index
    %c0_40 = arith.constant 0 : index
    %30 = vector.load %arg3[%c0_38, %c0_39, %c22, %c0_40] : memref<1x1x152x4xbf16, #tpu.memory_space<vmem>>, vector<1x1x128x4xbf16>
    %31 = vector.shape_cast %30 : vector<1x1x128x4xbf16> to vector<128x4xbf16>
    %c0_41 = arith.constant 0 : index
    %c32 = arith.constant 32 : index
    %32 = vector.load %arg7[%c0_41, %c32] : memref<128x36xbf16, #tpu.memory_space<vmem>>, vector<128x4xbf16>
    tpu.vector_store %arg7[%c0_41, %c32], %31 {strides = array<i32>} : memref<128x36xbf16, #tpu.memory_space<vmem>>, vector<128x4xbf16>,
    %c0_42 = arith.constant 0 : index
    %c0_43 = arith.constant 0 : index
    %33 = vector.load %arg6[%c0_42, %c0_43] : memref<128x16xf32, #tpu.memory_space<vmem>>, vector<128x16xf32>
    %c0_44 = arith.constant 0 : index
    %c0_45 = arith.constant 0 : index
    %34 = vector.load %arg7[%c0_44, %c0_45] : memref<128x36xbf16, #tpu.memory_space<vmem>>, vector<128x36xbf16>
    %cst = arith.constant dense<0.000000e+00> : vector<128x16xf32>
    %35 = tpu.matmul %34, %5, %cst {dimension_numbers = #tpu.dot_dimension_numbers<[1], [0], [0], [1], [0, 0, 1, 1], [], []>} : vector<128x36xbf16>, vector<36x16xbf16>, vector<128x16xf32> -> vector<128x16xf32>
    %36 = arith.addf %33, %35 : vector<128x16xf32>
    %c0_46 = arith.constant 0 : index
    %c0_47 = arith.constant 0 : index
    %37 = vector.load %arg6[%c0_46, %c0_47] : memref<128x16xf32, #tpu.memory_space<vmem>>, vector<128x16xf32>
    tpu.vector_store %arg6[%c0_46, %c0_47], %36 {strides = array<i32>} : memref<128x16xf32, #tpu.memory_space<vmem>>, vector<128x16xf32>,
    %c2_i32 = arith.constant 2 : i32
    %38 = arith.cmpi eq, %arg2, %c2_i32 : i32
    %39 = arith.extui %38 : i1 to i32
    %c0_i32_48 = arith.constant 0 : i32
    %40 = arith.cmpi ne, %39, %c0_i32_48 : i32
    scf.if %40 {
      %c0_49 = arith.constant 0 : index
      %c0_50 = arith.constant 0 : index
      %41 = vector.load %arg6[%c0_49, %c0_50] : memref<128x16xf32, #tpu.memory_space<vmem>>, vector<16x16xf32>
      %c0_51 = arith.constant 0 : index
      %c0_52 = arith.constant 0 : index
      %c0_53 = arith.constant 0 : index
      %c0_54 = arith.constant 0 : index
      %42 = vector.load %arg5[%c0_51, %c0_52, %c0_53, %c0_54] : memref<1x1x16x128xf32, #tpu.memory_space<vmem>>, vector<1x1x16x16xf32>
      %43 = vector.shape_cast %42 : vector<1x1x16x16xf32> to vector<16x16xf32>
      %44 = vector.shape_cast %41 : vector<16x16xf32> to vector<1x1x16x16xf32>
      tpu.vector_store %arg5[%c0_51, %c0_52, %c0_53, %c0_54], %44 {strides = array<i32>} : memref<1x1x16x128xf32, #tpu.memory_space<vmem>>, vector<1x1x16x16xf32>,
      %c16_55 = arith.constant 16 : index
      %c0_56 = arith.constant 0 : index
      %45 = vector.load %arg6[%c16_55, %c0_56] : memref<128x16xf32, #tpu.memory_space<vmem>>, vector<16x16xf32>
      %c0_57 = arith.constant 0 : index
      %c0_58 = arith.constant 0 : index
      %c0_59 = arith.constant 0 : index
      %c16_60 = arith.constant 16 : index
      %46 = vector.load %arg5[%c0_57, %c0_58, %c0_59, %c16_60] : memref<1x1x16x128xf32, #tpu.memory_space<vmem>>, vector<1x1x16x16xf32>
      %47 = vector.shape_cast %46 : vector<1x1x16x16xf32> to vector<16x16xf32>
      %48 = vector.shape_cast %45 : vector<16x16xf32> to vector<1x1x16x16xf32>
      tpu.vector_store %arg5[%c0_57, %c0_58, %c0_59, %c16_60], %48 {strides = array<i32>} : memref<1x1x16x128xf32, #tpu.memory_space<vmem>>, vector<1x1x16x16xf32>,
      %c32_61 = arith.constant 32 : index
      %c0_62 = arith.constant 0 : index
      %49 = vector.load %arg6[%c32_61, %c0_62] : memref<128x16xf32, #tpu.memory_space<vmem>>, vector<16x16xf32>
      %c0_63 = arith.constant 0 : index
      %c0_64 = arith.constant 0 : index
      %c0_65 = arith.constant 0 : index
      %c32_66 = arith.constant 32 : index
      %50 = vector.load %arg5[%c0_63, %c0_64, %c0_65, %c32_66] : memref<1x1x16x128xf32, #tpu.memory_space<vmem>>, vector<1x1x16x16xf32>
      %51 = vector.shape_cast %50 : vector<1x1x16x16xf32> to vector<16x16xf32>
      %52 = vector.shape_cast %49 : vector<16x16xf32> to vector<1x1x16x16xf32>
      tpu.vector_store %arg5[%c0_63, %c0_64, %c0_65, %c32_66], %52 {strides = array<i32>} : memref<1x1x16x128xf32, #tpu.memory_space<vmem>>, vector<1x1x16x16xf32>,
      %c48 = arith.constant 48 : index
      %c0_67 = arith.constant 0 : index
      %53 = vector.load %arg6[%c48, %c0_67] : memref<128x16xf32, #tpu.memory_space<vmem>>, vector<16x16xf32>
      %c0_68 = arith.constant 0 : index
      %c0_69 = arith.constant 0 : index
      %c0_70 = arith.constant 0 : index
      %c48_71 = arith.constant 48 : index
      %54 = vector.load %arg5[%c0_68, %c0_69, %c0_70, %c48_71] : memref<1x1x16x128xf32, #tpu.memory_space<vmem>>, vector<1x1x16x16xf32>
      %55 = vector.shape_cast %54 : vector<1x1x16x16xf32> to vector<16x16xf32>
      %56 = vector.shape_cast %53 : vector<16x16xf32> to vector<1x1x16x16xf32>
      tpu.vector_store %arg5[%c0_68, %c0_69, %c0_70, %c48_71], %56 {strides = array<i32>} : memref<1x1x16x128xf32, #tpu.memory_space<vmem>>, vector<1x1x16x16xf32>,
      %c64 = arith.constant 64 : index
      %c0_72 = arith.constant 0 : index
      %57 = vector.load %arg6[%c64, %c0_72] : memref<128x16xf32, #tpu.memory_space<vmem>>, vector<16x16xf32>
      %c0_73 = arith.constant 0 : index
      %c0_74 = arith.constant 0 : index
      %c0_75 = arith.constant 0 : index
      %c64_76 = arith.constant 64 : index
      %58 = vector.load %arg5[%c0_73, %c0_74, %c0_75, %c64_76] : memref<1x1x16x128xf32, #tpu.memory_space<vmem>>, vector<1x1x16x16xf32>
      %59 = vector.shape_cast %58 : vector<1x1x16x16xf32> to vector<16x16xf32>
      %60 = vector.shape_cast %57 : vector<16x16xf32> to vector<1x1x16x16xf32>
      tpu.vector_store %arg5[%c0_73, %c0_74, %c0_75, %c64_76], %60 {strides = array<i32>} : memref<1x1x16x128xf32, #tpu.memory_space<vmem>>, vector<1x1x16x16xf32>,
      %c80 = arith.constant 80 : index
      %c0_77 = arith.constant 0 : index
      %61 = vector.load %arg6[%c80, %c0_77] : memref<128x16xf32, #tpu.memory_space<vmem>>, vector<16x16xf32>
      %c0_78 = arith.constant 0 : index
      %c0_79 = arith.constant 0 : index
      %c0_80 = arith.constant 0 : index
      %c80_81 = arith.constant 80 : index
      %62 = vector.load %arg5[%c0_78, %c0_79, %c0_80, %c80_81] : memref<1x1x16x128xf32, #tpu.memory_space<vmem>>, vector<1x1x16x16xf32>
      %63 = vector.shape_cast %62 : vector<1x1x16x16xf32> to vector<16x16xf32>
      %64 = vector.shape_cast %61 : vector<16x16xf32> to vector<1x1x16x16xf32>
      tpu.vector_store %arg5[%c0_78, %c0_79, %c0_80, %c80_81], %64 {strides = array<i32>} : memref<1x1x16x128xf32, #tpu.memory_space<vmem>>, vector<1x1x16x16xf32>,
      %c96 = arith.constant 96 : index
      %c0_82 = arith.constant 0 : index
      %65 = vector.load %arg6[%c96, %c0_82] : memref<128x16xf32, #tpu.memory_space<vmem>>, vector<16x16xf32>
      %c0_83 = arith.constant 0 : index
      %c0_84 = arith.constant 0 : index
      %c0_85 = arith.constant 0 : index
      %c96_86 = arith.constant 96 : index
      %66 = vector.load %arg5[%c0_83, %c0_84, %c0_85, %c96_86] : memref<1x1x16x128xf32, #tpu.memory_space<vmem>>, vector<1x1x16x16xf32>
      %67 = vector.shape_cast %66 : vector<1x1x16x16xf32> to vector<16x16xf32>
      %68 = vector.shape_cast %65 : vector<16x16xf32> to vector<1x1x16x16xf32>
      tpu.vector_store %arg5[%c0_83, %c0_84, %c0_85, %c96_86], %68 {strides = array<i32>} : memref<1x1x16x128xf32, #tpu.memory_space<vmem>>, vector<1x1x16x16xf32>,
      %c112 = arith.constant 112 : index
      %c0_87 = arith.constant 0 : index
      %69 = vector.load %arg6[%c112, %c0_87] : memref<128x16xf32, #tpu.memory_space<vmem>>, vector<16x16xf32>
      %c0_88 = arith.constant 0 : index
      %c0_89 = arith.constant 0 : index
      %c0_90 = arith.constant 0 : index
      %c112_91 = arith.constant 112 : index
      %70 = vector.load %arg5[%c0_88, %c0_89, %c0_90, %c112_91] : memref<1x1x16x128xf32, #tpu.memory_space<vmem>>, vector<1x1x16x16xf32>
      %71 = vector.shape_cast %70 : vector<1x1x16x16xf32> to vector<16x16xf32>
      %72 = vector.shape_cast %69 : vector<16x16xf32> to vector<1x1x16x16xf32>
      tpu.vector_store %arg5[%c0_88, %c0_89, %c0_90, %c112_91], %72 {strides = array<i32>} : memref<1x1x16x128xf32, #tpu.memory_space<vmem>>, vector<1x1x16x16xf32>,
    } else {
    }
    return
  }
  func.func @transform_0(%arg0: i32, %arg1: i32, %arg2: i32) -> (i32, i32, i32, i32) {
    %c1_i32 = arith.constant 1 : i32
    %0 = arith.muli %arg1, %c1_i32 : i32
    %1 = arith.addi %0, %arg2 : i32
    %c0_i32 = arith.constant 0 : i32
    %c0_i32_0 = arith.constant 0 : i32
    %c0_i32_1 = arith.constant 0 : i32
    return %arg0, %1, %c0_i32, %c0_i32_0 : i32, i32, i32, i32
  }
  func.func @transform_1(%arg0: i32, %arg1: i32, %arg2: i32) -> (i32, i32, i32) {
    %c0_i32 = arith.constant 0 : i32
    %c0_i32_0 = arith.constant 0 : i32
    %c0_i32_1 = arith.constant 0 : i32
    %c0_i32_2 = arith.constant 0 : i32
    return %c0_i32, %c0_i32_0, %c0_i32_1 : i32, i32, i32
  }
  func.func @transform_2(%arg0: i32, %arg1: i32, %arg2: i32) -> (i32, i32, i32, i32) {
    %c0_i32 = arith.constant 0 : i32
    %c0_i32_0 = arith.constant 0 : i32
    %c0_i32_1 = arith.constant 0 : i32
    return %arg0, %arg1, %c0_i32, %c0_i32_0 : i32, i32, i32, i32
  }
}

</mosaic_0001>

<llo_original>
// kernel: symmetric_conv3d.1
$region0: #{symmetric_conv3d.1}
  #allocation0 [shape = 'u32[]', space=smem, size = 0x4, offset = 0x4, fixed_abs, tag = 'smem constant byte address 0x4 - core index']
  #allocation1 [shape = 'u32[144,128]{1,0:T(1,128)}', space=vmem, size = 0x12000, scoped, tag = 'internal scratch']
  #allocation2 [shape = 'f32[128,16]{1,0:T(8,128)}', space=vmem, size = 0x10000, scoped, tag = 'scratch operand']
  #allocation3 [shape = 'bf16[128,36]{1,0:T(8,128)(2,1)}', space=vmem, size = 0x8000, scoped, tag = 'scratch operand']
  %s0 = inlined_call_operand.vmem [shape: bf16[2,6,152,4], index: 0, kind: input, shape index: {}]
  %s1 = inlined_call_operand.vmem [shape: bf16[3,36,16], index: 1, kind: input, shape index: {}]
  %s2 = inlined_call_operand.vmem [shape: f32[2,4,16,128], index: 2, kind: output, shape index: {}]
  %s3 = sld [smem:[#allocation0]]
  $region49: #{symmetric_conv3d.1} parent=0
    _
  %s5 = ssub.s32 1, %s3
  %s6 = scalar_select 0, %s5, %s3
  loop: start=0, step=1, limit=26
  $region2: #{symmetric_conv3d.1} parent=0 // loop_pre_header
    _
  $region3: #{symmetric_conv3d.1} parent=0 // loop_header
    %s8 = sphi 0, %s12
    %p9 = scmp.ge.s32.totalorder %s8, 26
    %s15 = sphi 0, %s34
    %s16 = sphi 0, %s30
    %s17 = sphi 0, %s26
    %s18 = sphi 0, %s15
    %s19 = sphi 0, %s16
    %s20 = sphi 0, %s17
    %s21 = sphi 0, %s18
    %s22 = sphi 0, %s19
    %s23 = sphi 0, %s20
    %s41 = sphi 0, %s43
    %s44 = sphi 0, %s41
    %s45 = sphi 0, %s44
    %s61 = sphi 0, %s45
    %s65 = sphi 0, %s65
    %s67 = sphi 0, %s65
    %s68 = sphi 0, %s67
    %s82 = sphi 0, %s68
    %s90 = sphi 0, %s92
    %s93 = sphi 0, %s90
    %s94 = sphi 0, %s93
    %s110 = sphi 0, %s94
  $region4: #{symmetric_conv3d.1} parent=0 // loop_header_branch
    %11 = sbr.rel (%p9) target = $region8
  $region5: #{symmetric_conv3d.1} parent=0 // loop_body
    %s13 = ssub.s32 %s8, 1
    %s14 = ssub.s32 %s8, 2
    %s24 = sadd.s32 1, %s17
    %p25 = scmp.ge.s32.totalorder %s24, 3
    %s26 = scalar_select %p25, 0, %s24
    %s27 = sadd.s32 1, %s16
    %s28 = scalar_select %p25, %s27, %s16
    %p29 = scmp.ge.s32.totalorder %s28, 4
    %s30 = scalar_select %p29, 0, %s28
    %s31 = sadd.s32 1, %s15
    %s32 = scalar_select %p29, %s31, %s15
    %p33 = scmp.ge.s32.totalorder %s32, 2
    %s34 = scalar_select %p33, 0, %s32
    %s35 = sadd.s32 %s16, %s17
    %s36 = sadd.s32 %s30, %s26
    %s37 = ssub.s32 %s15, %s34
    %s38 = ssub.s32 %s35, %s36
    %s39 = sor.u32 %s37, %s38
    %p40 = scmp.eq.s32.totalorder %s39, 0
    %s42 = sadd.s32 %s41, 1
    %s43 = scalar_select %p40, %s41, %s42
    %p46 = pneg %p40
    %p47 = scmp.eq.s32.totalorder %s8, 23
    %p48 = por %p46, %p47
    %p49 = scmp.ne.s32.totalorder %s41, %s44
    %p50 = scmp.eq.s32.totalorder %s8, 0
    %p51 = por %p49, %p50
    %p52 = scmp.ne.s32.totalorder %s41, %s44
    %p53 = scmp.eq.s32.totalorder %s13, 23
    %p54 = por %p52, %p53
    %p55 = scmp.ne.s32.totalorder %s44, %s45
    %p56 = scmp.eq.s32.totalorder %s13, 0
    %p57 = por %p55, %p56
    %p58 = scmp.ne.s32.totalorder %s44, %s45
    %p59 = scmp.eq.s32.totalorder %s14, 23
    %p60 = por %p58, %p59
    %p62 = scmp.ne.s32.totalorder %s45, %s61
    %p63 = scmp.eq.s32.totalorder %s14, 0
    %p64 = por %p62, %p63
    %s66 = sadd.s32 %s65, 1
    %p69 = scmp.eq.s32.totalorder %s8, 23
    %p70 = scmp.ne.s32.totalorder %s65, %s67
    %p71 = scmp.eq.s32.totalorder %s8, 0
    %p72 = por %p70, %p71
    %p73 = scmp.ne.s32.totalorder %s65, %s67
    %p74 = scmp.eq.s32.totalorder %s13, 23
    %p75 = por %p73, %p74
    %p76 = scmp.ne.s32.totalorder %s67, %s68
    %p77 = scmp.eq.s32.totalorder %s13, 0
    %p78 = por %p76, %p77
    %p79 = scmp.ne.s32.totalorder %s67, %s68
    %p80 = scmp.eq.s32.totalorder %s14, 23
    %p81 = por %p79, %p80
    %p83 = scmp.ne.s32.totalorder %s68, %s82
    %p84 = scmp.eq.s32.totalorder %s14, 0
    %p85 = por %p83, %p84
    %s86 = ssub.s32 %s15, %s34
    %s87 = ssub.s32 %s16, %s30
    %s88 = sor.u32 %s86, %s87
    %p89 = scmp.eq.s32.totalorder %s88, 0
    %s91 = sadd.s32 %s90, 1
    %s92 = scalar_select %p89, %s90, %s91
    %p95 = pneg %p89
    %p96 = scmp.eq.s32.totalorder %s8, 23
    %p97 = por %p95, %p96
    %p98 = scmp.ne.s32.totalorder %s90, %s93
    %p99 = scmp.eq.s32.totalorder %s8, 0
    %p100 = por %p98, %p99
    %p101 = scmp.ne.s32.totalorder %s90, %s93
    %p102 = scmp.eq.s32.totalorder %s13, 23
    %p103 = por %p101, %p102
    %p104 = scmp.ne.s32.totalorder %s93, %s94
    %p105 = scmp.eq.s32.totalorder %s13, 0
    %p106 = por %p104, %p105
    %p107 = scmp.ne.s32.totalorder %s93, %s94
    %p108 = scmp.eq.s32.totalorder %s14, 23
    %p109 = por %p107, %p108
    %p111 = scmp.ne.s32.totalorder %s94, %s110
    %p112 = scmp.eq.s32.totalorder %s14, 0
    %p113 = por %p111, %p112
    %p114 = scmp.le.s32.totalorder 1, %s8
    %p115 = scmp.lt.s32.totalorder %s8, 25
    %p116 = pnand %p114, %p115
    %p117 = pneg %p116
    // Predicated region
    $region9: #{symmetric_conv3d.1} parent=5 // pred_check
      _
    $region10: #{symmetric_conv3d.1} parent=5 // pred_check_branch
      %119 = sbr.rel (%p116) target = $region12
    $region11: #{symmetric_conv3d.1} parent=5 // pred_region
      %s120 = ssub.s32 %s8, 1
      // Predicated region
      $region13: #{symmetric_conv3d.1} parent=11 // pred_check
        %p121 = pneg %p78
      $region14: #{symmetric_conv3d.1} parent=11 // pred_check_branch
        %123 = sbr.rel (%p121) target = $region16
      $region15: #{symmetric_conv3d.1} parent=11 // pred_region
        _
      $region16: #{symmetric_conv3d.1} parent=11 // pred_fallthru
        _
    $region12: #{symmetric_conv3d.1} parent=5 // pred_fallthru
      _
    %p124 = scmp.lt.s32.totalorder %s8, 24
    // Predicated region
    $region17: #{symmetric_conv3d.1} parent=5 // pred_check
      %p125 = pneg %p124
    $region18: #{symmetric_conv3d.1} parent=5 // pred_check_branch
      %127 = sbr.rel (%p125) target = $region20
    $region19: #{symmetric_conv3d.1} parent=5 // pred_region
      // Predicated region
      $region21: #{symmetric_conv3d.1} parent=19 // pred_check
        %p128 = pneg %p51
      $region22: #{symmetric_conv3d.1} parent=19 // pred_check_branch
        %130 = sbr.rel (%p128) target = $region24
      $region23: #{symmetric_conv3d.1} parent=19 // pred_region
        %s131 = sadd.s32 %s16, %s17
        %p132 = scmp.lt.s32.totalorder %s15, 1
        %s133 = scalar_select %p132, %s15, 1
        %p134 = scmp.lt.s32.totalorder %s131, 5
        %s135 = scalar_select %p134, %s131, 5
        %s136 = smul.addr %s135, 19
        %s137 = smul.addr %s133, 114
        %s138 = sadd.s32 %s136, %s137
        %s139 = smul.addr %s138, 4
        %s140 = scalar_lea.vmem %s0, %s139
        %s141 = sadd.s32 %s16, %s17
      $region24: #{symmetric_conv3d.1} parent=19 // pred_fallthru
        _
    $region20: #{symmetric_conv3d.1} parent=5 // pred_fallthru
      _
    %p142 = scmp.le.s32.totalorder 1, %s8
    %p143 = scmp.lt.s32.totalorder %s8, 25
    %p144 = pnand %p142, %p143
    %p145 = pneg %p144
    // Predicated region
    $region25: #{symmetric_conv3d.1} parent=5 // pred_check
      _
    $region26: #{symmetric_conv3d.1} parent=5 // pred_check_branch
      %147 = sbr.rel (%p144) target = $region28
    $region27: #{symmetric_conv3d.1} parent=5 // pred_region
      %s148 = ssub.s32 %s8, 1
      %s149 = sadd.s32 %s19, %s20
      %p150 = scmp.lt.s32.totalorder %s18, 1
      %s151 = scalar_select %p150, %s18, 1
      %p152 = scmp.lt.s32.totalorder %s149, 5
      %s153 = scalar_select %p152, %s149, 5
      %s154 = smul.addr %s153, 19
      %s155 = smul.addr %s151, 114
      %s156 = sadd.s32 %s154, %s155
      %s157 = smul.addr %s156, 4
      %s158 = scalar_lea.vmem %s0, %s157
      %p159 = pneg %p57
      %p160 = pneg %p54
      %p161 = pneg %p78
      %p162 = pneg %p75
      %p163 = pneg %p106
      %p164 = pneg %p103
      %p165 = scmp.lt.s32.totalorder %s18, 1
      %s166 = scalar_select %p165, %s18, 1
      %p167 = scmp.lt.s32.totalorder %s19, 3
      %s168 = scalar_select %p167, %s19, 3
      %s169 = smul.addr %s168, 2
      %s170 = smul.addr %s166, 8
      %s171 = sadd.s32 %s169, %s170
      %s172 = smul.addr %s171, 8
      %s173 = scalar_lea.vmem %s2, %s172
      %s174 = sadd.s32 %s19, %s20
      %p175 = scmp.lt.s32.totalorder %s18, 1
      %s176 = scalar_select %p175, %s18, 1
      %p177 = scmp.lt.s32.totalorder %s174, 5
      %s178 = scalar_select %p177, %s174, 5
      %s179 = smul.addr %s178, 19
      %s180 = smul.addr %s176, 114
      %s181 = sadd.s32 %s179, %s180
      %s182 = smul.addr %s181, 4
      %s183 = scalar_lea.vmem %s0, %s182
      %s184 = sadd.s32 %s19, %s20
      %p185 = scmp.lt.s32.totalorder %s18, 1
      %s186 = scalar_select %p185, %s18, 1
      %p187 = scmp.lt.s32.totalorder %s19, 3
      %s188 = scalar_select %p187, %s19, 3
      %s189 = smul.addr %s188, 2
      %s190 = smul.addr %s186, 8
      %s191 = sadd.s32 %s189, %s190
      %s192 = smul.addr %s191, 8
      %s193 = scalar_lea.vmem %s2, %s192
      %p195 = scmp.eq.s32.totalorder %s20, 0
      // Predicated region
      $region29: #{symmetric_conv3d.1} parent=27 // pred_check
        %p196 = pneg %p195
      $region30: #{symmetric_conv3d.1} parent=27 // pred_check_branch
        %198 = sbr.rel (%p196) target = $region32
      $region31: #{symmetric_conv3d.1} parent=27 // pred_region
        %vm199 = vcmask 130048
        %200 = vst.msk [vmem:[#allocation2] sm:$0xff] %vm199, 0.0
        %201 = vst.msk [vmem:[#allocation2 + $0x8] sm:$0xff] %vm199, 0.0
        %202 = vst.msk [vmem:[#allocation2 + $0x10] sm:$0xff] %vm199, 0.0
        %203 = vst.msk [vmem:[#allocation2 + $0x18] sm:$0xff] %vm199, 0.0
        %204 = vst.msk [vmem:[#allocation2 + $0x20] sm:$0xff] %vm199, 0.0
        %205 = vst.msk [vmem:[#allocation2 + $0x28] sm:$0xff] %vm199, 0.0
        %206 = vst.msk [vmem:[#allocation2 + $0x30] sm:$0xff] %vm199, 0.0
        %207 = vst.msk [vmem:[#allocation2 + $0x38] sm:$0xff] %vm199, 0.0
        %208 = vst.msk [vmem:[#allocation2 + $0x40] sm:$0xff] %vm199, 0.0
        %209 = vst.msk [vmem:[#allocation2 + $0x48] sm:$0xff] %vm199, 0.0
        %210 = vst.msk [vmem:[#allocation2 + $0x50] sm:$0xff] %vm199, 0.0
        %211 = vst.msk [vmem:[#allocation2 + $0x58] sm:$0xff] %vm199, 0.0
        %212 = vst.msk [vmem:[#allocation2 + $0x60] sm:$0xff] %vm199, 0.0
        %213 = vst.msk [vmem:[#allocation2 + $0x68] sm:$0xff] %vm199, 0.0
        %214 = vst.msk [vmem:[#allocation2 + $0x70] sm:$0xff] %vm199, 0.0
        %215 = vst.msk [vmem:[#allocation2 + $0x78] sm:$0xff] %vm199, 0.0
      $region32: #{symmetric_conv3d.1} parent=27 // pred_fallthru
        _
      %s216 = smul.u32 %s20, 5
      %s217 = smul.addr %s216, 4
      %s218 = scalar_lea.vmem %s1, %s217
      %v219 = vld [vmem:[%s218] sm:$0xf]
      %v220 = vld [vmem:[%s218 + $0x4] sm:$0xf]
      %v221 = vld [vmem:[%s218 + $0x8] sm:$0xf]
      %v222 = vld [vmem:[%s218 + $0xc] sm:$0xf]
      %v223 = vld [vmem:[%s218 + $0x10] sm:$0x3]
      %v224 = vld [vmem:[%s183] sm:$0xf]
      %v225 = vld [vmem:[%s183 + $0x4] sm:$0xf]
      %v226 = vld [vmem:[%s183 + $0x8] sm:$0xf]
      %v227 = vld [vmem:[%s183 + $0xc] sm:$0xf]
      %v228 = vld [vmem:[%s183 + $0x10] sm:$0xf]
      %v229 = vld [vmem:[%s183 + $0x14] sm:$0xf]
      %v230 = vld [vmem:[%s183 + $0x18] sm:$0xf]
      %v231 = vld [vmem:[%s183 + $0x1c] sm:$0xf]
      %v232 = vld [vmem:[%s183 + $0x20] sm:$0xf]
      %v233 = vld [vmem:[%s183 + $0x24] sm:$0xf]
      %v234 = vld [vmem:[%s183 + $0x28] sm:$0xf]
      %v235 = vld [vmem:[%s183 + $0x2c] sm:$0xf]
      %v236 = vld [vmem:[%s183 + $0x30] sm:$0xf]
      %v237 = vld [vmem:[%s183 + $0x34] sm:$0xf]
      %v238 = vld [vmem:[%s183 + $0x38] sm:$0xf]
      %v239 = vld [vmem:[%s183 + $0x3c] sm:$0xf]
      %vm240 = vcmask 27648
      %241 = vst.msk [vmem:[#allocation3] sm:$0xf] %vm240, %v224
      %242 = vst.msk [vmem:[#allocation3 + $0x4] sm:$0xf] %vm240, %v225
      %243 = vst.msk [vmem:[#allocation3 + $0x8] sm:$0xf] %vm240, %v226
      %244 = vst.msk [vmem:[#allocation3 + $0xc] sm:$0xf] %vm240, %v227
      %245 = vst.msk [vmem:[#allocation3 + $0x10] sm:$0xf] %vm240, %v228
      %246 = vst.msk [vmem:[#allocation3 + $0x14] sm:$0xf] %vm240, %v229
      %247 = vst.msk [vmem:[#allocation3 + $0x18] sm:$0xf] %vm240, %v230
      %248 = vst.msk [vmem:[#allocation3 + $0x1c] sm:$0xf] %vm240, %v231
      %249 = vst.msk [vmem:[#allocation3 + $0x20] sm:$0xf] %vm240, %v232
      %250 = vst.msk [vmem:[#allocation3 + $0x24] sm:$0xf] %vm240, %v233
      %251 = vst.msk [vmem:[#allocation3 + $0x28] sm:$0xf] %vm240, %v234
      %252 = vst.msk [vmem:[#allocation3 + $0x2c] sm:$0xf] %vm240, %v235
      %253 = vst.msk [vmem:[#allocation3 + $0x30] sm:$0xf] %vm240, %v236
      %254 = vst.msk [vmem:[#allocation3 + $0x34] sm:$0xf] %vm240, %v237
      %255 = vst.msk [vmem:[#allocation3 + $0x38] sm:$0xf] %vm240, %v238
      %256 = vst.msk [vmem:[#allocation3 + $0x3c] sm:$0xf] %vm240, %v239
      %v257 = vld [vmem:[%s183] sm:$0xf]
      %v258 = vld [vmem:[%s183 + $0x4] sm:$0xf]
      %v259 = vld [vmem:[%s183 + $0x8] sm:$0xf]
      %v260 = vld [vmem:[%s183 + $0xc] sm:$0xf]
      %v261 = vld [vmem:[%s183 + $0x10] sm:$0xf]
      %v262 = vld [vmem:[%s183 + $0x14] sm:$0xf]
      %v263 = vld [vmem:[%s183 + $0x18] sm:$0xf]
      %v264 = vld [vmem:[%s183 + $0x1c] sm:$0xf]
      %v265 = vld [vmem:[%s183 + $0x20] sm:$0xf]
      %v266 = vld [vmem:[%s183 + $0x24] sm:$0xf]
      %v267 = vld [vmem:[%s183 + $0x28] sm:$0xf]
      %v268 = vld [vmem:[%s183 + $0x2c] sm:$0xf]
      %v269 = vld [vmem:[%s183 + $0x30] sm:$0xf]
      %v270 = vld [vmem:[%s183 + $0x34] sm:$0xf]
      %v271 = vld [vmem:[%s183 + $0x38] sm:$0xf]
      %v272 = vld [vmem:[%s183 + $0x3c] sm:$0xf]
      %v273 = vld [vmem:[%s183 + $0x40] sm:$0x1]
      %vm274 = vsmask.f32 3328
      %vm275 = vsmask.f32 7440
      %vm276 = vmor %vm274, %vm275
      %v278 = vshrl.u32 %v257, 16
      %v280 = vrot.slane %v278, 4
      %v281 = vshll.u32 %v257, 16
      %v283 = vrot.slane %v281, 5
      %v284 = vor.u32 %v280, %v283
      %v285 = vrot.slane %v284, 4
      %v287 = vshll.u32 %v258, 16
      %v289 = vrot.slane %v287, 5
      %v290 = vsel %vm276, %v285, %v289
      %v291 = vshrl.u32 %v258, 16
      %v293 = vrot.slane %v291, 4
      %v294 = vor.u32 %v293, %v289
      %v295 = vrot.slane %v294, 4
      %v297 = vshll.u32 %v259, 16
      %v299 = vrot.slane %v297, 5
      %v300 = vsel %vm276, %v295, %v299
      %v301 = vshrl.u32 %v259, 16
      %v303 = vrot.slane %v301, 4
      %v304 = vor.u32 %v303, %v299
      %v305 = vrot.slane %v304, 4
      %v307 = vshll.u32 %v260, 16
      %v309 = vrot.slane %v307, 5
      %v310 = vsel %vm276, %v305, %v309
      %v311 = vshrl.u32 %v260, 16
      %v313 = vrot.slane %v311, 4
      %v314 = vor.u32 %v313, %v309
      %v315 = vrot.slane %v314, 4
      %v317 = vshll.u32 %v261, 16
      %v319 = vrot.slane %v317, 5
      %v320 = vsel %vm276, %v315, %v319
      %v321 = vshrl.u32 %v261, 16
      %v323 = vrot.slane %v321, 4
      %v324 = vor.u32 %v323, %v319
      %v325 = vrot.slane %v324, 4
      %v327 = vshll.u32 %v262, 16
      %v329 = vrot.slane %v327, 5
      %v330 = vsel %vm276, %v325, %v329
      %v331 = vshrl.u32 %v262, 16
      %v333 = vrot.slane %v331, 4
      %v334 = vor.u32 %v333, %v329
      %v335 = vrot.slane %v334, 4
      %v337 = vshll.u32 %v263, 16
      %v339 = vrot.slane %v337, 5
      %v340 = vsel %vm276, %v335, %v339
      %v341 = vshrl.u32 %v263, 16
      %v343 = vrot.slane %v341, 4
      %v344 = vor.u32 %v343, %v339
      %v345 = vrot.slane %v344, 4
      %v347 = vshll.u32 %v264, 16
      %v349 = vrot.slane %v347, 5
      %v350 = vsel %vm276, %v345, %v349
      %v351 = vshrl.u32 %v264, 16
      %v353 = vrot.slane %v351, 4
      %v354 = vor.u32 %v353, %v349
      %v355 = vrot.slane %v354, 4
      %v357 = vshll.u32 %v265, 16
      %v359 = vrot.slane %v357, 5
      %v360 = vsel %vm276, %v355, %v359
      %v361 = vshrl.u32 %v265, 16
      %v363 = vrot.slane %v361, 4
      %v364 = vor.u32 %v363, %v359
      %v365 = vrot.slane %v364, 4
      %v367 = vshll.u32 %v266, 16
      %v369 = vrot.slane %v367, 5
      %v370 = vsel %vm276, %v365, %v369
      %v371 = vshrl.u32 %v266, 16
      %v373 = vrot.slane %v371, 4
      %v374 = vor.u32 %v373, %v369
      %v375 = vrot.slane %v374, 4
      %v377 = vshll.u32 %v267, 16
      %v379 = vrot.slane %v377, 5
      %v380 = vsel %vm276, %v375, %v379
      %v381 = vshrl.u32 %v267, 16
      %v383 = vrot.slane %v381, 4
      %v384 = vor.u32 %v383, %v379
      %v385 = vrot.slane %v384, 4
      %v387 = vshll.u32 %v268, 16
      %v389 = vrot.slane %v387, 5
      %v390 = vsel %vm276, %v385, %v389
      %v391 = vshrl.u32 %v268, 16
      %v393 = vrot.slane %v391, 4
      %v394 = vor.u32 %v393, %v389
      %v395 = vrot.slane %v394, 4
      %v397 = vshll.u32 %v269, 16
      %v399 = vrot.slane %v397, 5
      %v400 = vsel %vm276, %v395, %v399
      %v401 = vshrl.u32 %v269, 16
      %v403 = vrot.slane %v401, 4
      %v404 = vor.u32 %v403, %v399
      %v405 = vrot.slane %v404, 4
      %v407 = vshll.u32 %v270, 16
      %v409 = vrot.slane %v407, 5
      %v410 = vsel %vm276, %v405, %v409
      %v411 = vshrl.u32 %v270, 16
      %v413 = vrot.slane %v411, 4
      %v414 = vor.u32 %v413, %v409
      %v415 = vrot.slane %v414, 4
      %v417 = vshll.u32 %v271, 16
      %v419 = vrot.slane %v417, 5
      %v420 = vsel %vm276, %v415, %v419
      %v421 = vshrl.u32 %v271, 16
      %v423 = vrot.slane %v421, 4
      %v424 = vor.u32 %v423, %v419
      %v425 = vrot.slane %v424, 4
      %v427 = vshll.u32 %v272, 16
      %v429 = vrot.slane %v427, 5
      %v430 = vsel %vm276, %v425, %v429
      %v431 = vshrl.u32 %v272, 16
      %v433 = vrot.slane %v431, 4
      %v434 = vor.u32 %v433, %v429
      %v435 = vrot.slane %v434, 4
      %v437 = vshll.u32 %v273, 16
      %v439 = vrot.slane %v437, 5
      %v440 = vsel %vm276, %v435, %v439
      %441 = vrot.lane.b32.xlu0 %v290, 4
      %v442 = vpop.permute.xlu0 %441
      %443 = vrot.lane.b32.xlu0 %v300, 4
      %v444 = vpop.permute.xlu0 %443
      %445 = vrot.lane.b32.xlu0 %v310, 4
      %v446 = vpop.permute.xlu0 %445
      %447 = vrot.lane.b32.xlu0 %v320, 4
      %v448 = vpop.permute.xlu0 %447
      %449 = vrot.lane.b32.xlu0 %v330, 4
      %v450 = vpop.permute.xlu0 %449
      %451 = vrot.lane.b32.xlu0 %v340, 4
      %v452 = vpop.permute.xlu0 %451
      %453 = vrot.lane.b32.xlu0 %v350, 4
      %v454 = vpop.permute.xlu0 %453
      %455 = vrot.lane.b32.xlu0 %v360, 4
      %v456 = vpop.permute.xlu0 %455
      %457 = vrot.lane.b32.xlu0 %v370, 4
      %v458 = vpop.permute.xlu0 %457
      %459 = vrot.lane.b32.xlu0 %v380, 4
      %v460 = vpop.permute.xlu0 %459
      %461 = vrot.lane.b32.xlu0 %v390, 4
      %v462 = vpop.permute.xlu0 %461
      %463 = vrot.lane.b32.xlu0 %v400, 4
      %v464 = vpop.permute.xlu0 %463
      %465 = vrot.lane.b32.xlu0 %v410, 4
      %v466 = vpop.permute.xlu0 %465
      %467 = vrot.lane.b32.xlu0 %v420, 4
      %v468 = vpop.permute.xlu0 %467
      %469 = vrot.lane.b32.xlu0 %v430, 4
      %v470 = vpop.permute.xlu0 %469
      %471 = vrot.lane.b32.xlu0 %v440, 4
      %v472 = vpop.permute.xlu0 %471
      %vm489 = vcmask 60448
      %490 = vst.msk [vmem:[#allocation3] sm:$0xf] %vm489, %v442
      %491 = vst.msk [vmem:[#allocation3 + $0x4] sm:$0xf] %vm489, %v444
      %492 = vst.msk [vmem:[#allocation3 + $0x8] sm:$0xf] %vm489, %v446
      %493 = vst.msk [vmem:[#allocation3 + $0xc] sm:$0xf] %vm489, %v448
      %494 = vst.msk [vmem:[#allocation3 + $0x10] sm:$0xf] %vm489, %v450
      %495 = vst.msk [vmem:[#allocation3 + $0x14] sm:$0xf] %vm489, %v452
      %496 = vst.msk [vmem:[#allocation3 + $0x18] sm:$0xf] %vm489, %v454
      %497 = vst.msk [vmem:[#allocation3 + $0x1c] sm:$0xf] %vm489, %v456
      %498 = vst.msk [vmem:[#allocation3 + $0x20] sm:$0xf] %vm489, %v458
      %499 = vst.msk [vmem:[#allocation3 + $0x24] sm:$0xf] %vm489, %v460
      %500 = vst.msk [vmem:[#allocation3 + $0x28] sm:$0xf] %vm489, %v462
      %501 = vst.msk [vmem:[#allocation3 + $0x2c] sm:$0xf] %vm489, %v464
      %502 = vst.msk [vmem:[#allocation3 + $0x30] sm:$0xf] %vm489, %v466
      %503 = vst.msk [vmem:[#allocation3 + $0x34] sm:$0xf] %vm489, %v468
      %504 = vst.msk [vmem:[#allocation3 + $0x38] sm:$0xf] %vm489, %v470
      %505 = vst.msk [vmem:[#allocation3 + $0x3c] sm:$0xf] %vm489, %v472
      %v506 = vld [vmem:[%s183] sm:$0xe]
      %v507 = vld [vmem:[%s183 + $0x4] sm:$0xf]
      %v508 = vld [vmem:[%s183 + $0x8] sm:$0xf]
      %v509 = vld [vmem:[%s183 + $0xc] sm:$0xf]
      %v510 = vld [vmem:[%s183 + $0x10] sm:$0xf]
      %v511 = vld [vmem:[%s183 + $0x14] sm:$0xf]
      %v512 = vld [vmem:[%s183 + $0x18] sm:$0xf]
      %v513 = vld [vmem:[%s183 + $0x1c] sm:$0xf]
      %v514 = vld [vmem:[%s183 + $0x20] sm:$0xf]
      %v515 = vld [vmem:[%s183 + $0x24] sm:$0xf]
      %v516 = vld [vmem:[%s183 + $0x28] sm:$0xf]
      %v517 = vld [vmem:[%s183 + $0x2c] sm:$0xf]
      %v518 = vld [vmem:[%s183 + $0x30] sm:$0xf]
      %v519 = vld [vmem:[%s183 + $0x34] sm:$0xf]
      %v520 = vld [vmem:[%s183 + $0x38] sm:$0xf]
      %v521 = vld [vmem:[%s183 + $0x3c] sm:$0xf]
      %v522 = vld [vmem:[%s183 + $0x40] sm:$0x1]
      %vm540 = vcmask 1042432
      %vm541 = vcmask 1046532
      %vm542 = vmor %vm540, %vm541
      %v543 = vrot.slane %v506, 5
      %v544 = vrot.slane %v543, 4
      %v545 = vrot.slane %v507, 5
      %v546 = vsel %vm542, %v544, %v545
      %v547 = vrot.slane %v545, 4
      %v548 = vrot.slane %v508, 5
      %v549 = vsel %vm542, %v547, %v548
      %v550 = vrot.slane %v548, 4
      %v551 = vrot.slane %v509, 5
      %v552 = vsel %vm542, %v550, %v551
      %v553 = vrot.slane %v551, 4
      %v554 = vrot.slane %v510, 5
      %v555 = vsel %vm542, %v553, %v554
      %v556 = vrot.slane %v554, 4
      %v557 = vrot.slane %v511, 5
      %v558 = vsel %vm542, %v556, %v557
      %v559 = vrot.slane %v557, 4
      %v560 = vrot.slane %v512, 5
      %v561 = vsel %vm542, %v559, %v560
      %v562 = vrot.slane %v560, 4
      %v563 = vrot.slane %v513, 5
      %v564 = vsel %vm542, %v562, %v563
      %v565 = vrot.slane %v563, 4
      %v566 = vrot.slane %v514, 5
      %v567 = vsel %vm542, %v565, %v566
      %v568 = vrot.slane %v566, 4
      %v569 = vrot.slane %v515, 5
      %v570 = vsel %vm542, %v568, %v569
      %v571 = vrot.slane %v569, 4
      %v572 = vrot.slane %v516, 5
      %v573 = vsel %vm542, %v571, %v572
      %v574 = vrot.slane %v572, 4
      %v575 = vrot.slane %v517, 5
      %v576 = vsel %vm542, %v574, %v575
      %v577 = vrot.slane %v575, 4
      %v578 = vrot.slane %v518, 5
      %v579 = vsel %vm542, %v577, %v578
      %v580 = vrot.slane %v578, 4
      %v581 = vrot.slane %v519, 5
      %v582 = vsel %vm542, %v580, %v581
      %v583 = vrot.slane %v581, 4
      %v584 = vrot.slane %v520, 5
      %v585 = vsel %vm542, %v583, %v584
      %v586 = vrot.slane %v584, 4
      %v587 = vrot.slane %v521, 5
      %v588 = vsel %vm542, %v586, %v587
      %v589 = vrot.slane %v587, 4
      %v590 = vrot.slane %v522, 5
      %v591 = vsel %vm542, %v589, %v590
      %592 = vrot.lane.b32.xlu0 %v546, 8
      %v593 = vpop.permute.xlu0 %592
      %594 = vrot.lane.b32.xlu0 %v549, 8
      %v595 = vpop.permute.xlu0 %594
      %596 = vrot.lane.b32.xlu0 %v552, 8
      %v597 = vpop.permute.xlu0 %596
      %598 = vrot.lane.b32.xlu0 %v555, 8
      %v599 = vpop.permute.xlu0 %598
      %600 = vrot.lane.b32.xlu0 %v558, 8
      %v601 = vpop.permute.xlu0 %600
      %602 = vrot.lane.b32.xlu0 %v561, 8
      %v603 = vpop.permute.xlu0 %602
      %604 = vrot.lane.b32.xlu0 %v564, 8
      %v605 = vpop.permute.xlu0 %604
      %606 = vrot.lane.b32.xlu0 %v567, 8
      %v607 = vpop.permute.xlu0 %606
      %608 = vrot.lane.b32.xlu0 %v570, 8
      %v609 = vpop.permute.xlu0 %608
      %610 = vrot.lane.b32.xlu0 %v573, 8
      %v611 = vpop.permute.xlu0 %610
      %612 = vrot.lane.b32.xlu0 %v576, 8
      %v613 = vpop.permute.xlu0 %612
      %614 = vrot.lane.b32.xlu0 %v579, 8
      %v615 = vpop.permute.xlu0 %614
      %616 = vrot.lane.b32.xlu0 %v582, 8
      %v617 = vpop.permute.xlu0 %616
      %618 = vrot.lane.b32.xlu0 %v585, 8
      %v619 = vpop.permute.xlu0 %618
      %620 = vrot.lane.b32.xlu0 %v588, 8
      %v621 = vpop.permute.xlu0 %620
      %622 = vrot.lane.b32.xlu0 %v591, 8
      %v623 = vpop.permute.xlu0 %622
      %vm640 = vcmask 93248
      %641 = vst.msk [vmem:[#allocation3] sm:$0xf] %vm640, %v593
      %642 = vst.msk [vmem:[#allocation3 + $0x4] sm:$0xf] %vm640, %v595
      %643 = vst.msk [vmem:[#allocation3 + $0x8] sm:$0xf] %vm640, %v597
      %644 = vst.msk [vmem:[#allocation3 + $0xc] sm:$0xf] %vm640, %v599
      %645 = vst.msk [vmem:[#allocation3 + $0x10] sm:$0xf] %vm640, %v601
      %646 = vst.msk [vmem:[#allocation3 + $0x14] sm:$0xf] %vm640, %v603
      %647 = vst.msk [vmem:[#allocation3 + $0x18] sm:$0xf] %vm640, %v605
      %648 = vst.msk [vmem:[#allocation3 + $0x1c] sm:$0xf] %vm640, %v607
      %649 = vst.msk [vmem:[#allocation3 + $0x20] sm:$0xf] %vm640, %v609
      %650 = vst.msk [vmem:[#allocation3 + $0x24] sm:$0xf] %vm640, %v611
      %651 = vst.msk [vmem:[#allocation3 + $0x28] sm:$0xf] %vm640, %v613
      %652 = vst.msk [vmem:[#allocation3 + $0x2c] sm:$0xf] %vm640, %v615
      %653 = vst.msk [vmem:[#allocation3 + $0x30] sm:$0xf] %vm640, %v617
      %654 = vst.msk [vmem:[#allocation3 + $0x34] sm:$0xf] %vm640, %v619
      %655 = vst.msk [vmem:[#allocation3 + $0x38] sm:$0xf] %vm640, %v621
      %656 = vst.msk [vmem:[#allocation3 + $0x3c] sm:$0xf] %vm640, %v623
      %v657 = vld [vmem:[%s183 + $0x4] sm:$0xe]
      %v658 = vld [vmem:[%s183 + $0x8] sm:$0xf]
      %v659 = vld [vmem:[%s183 + $0xc] sm:$0xf]
      %v660 = vld [vmem:[%s183 + $0x10] sm:$0xf]
      %v661 = vld [vmem:[%s183 + $0x14] sm:$0xf]
      %v662 = vld [vmem:[%s183 + $0x18] sm:$0xf]
      %v663 = vld [vmem:[%s183 + $0x1c] sm:$0xf]
      %v664 = vld [vmem:[%s183 + $0x20] sm:$0xf]
      %v665 = vld [vmem:[%s183 + $0x24] sm:$0xf]
      %v666 = vld [vmem:[%s183 + $0x28] sm:$0xf]
      %v667 = vld [vmem:[%s183 + $0x2c] sm:$0xf]
      %v668 = vld [vmem:[%s183 + $0x30] sm:$0xf]
      %v669 = vld [vmem:[%s183 + $0x34] sm:$0xf]
      %v670 = vld [vmem:[%s183 + $0x38] sm:$0xf]
      %v671 = vld [vmem:[%s183 + $0x3c] sm:$0xf]
      %v672 = vld [vmem:[%s183 + $0x40] sm:$0xf]
      %v673 = vld [vmem:[%s183 + $0x44] sm:$0x1]
      %v691 = vrot.slane %v657, 5
      %v692 = vrot.slane %v691, 4
      %v693 = vrot.slane %v658, 5
      %v694 = vsel %vm542, %v692, %v693
      %v695 = vrot.slane %v693, 4
      %v696 = vrot.slane %v659, 5
      %v697 = vsel %vm542, %v695, %v696
      %v698 = vrot.slane %v696, 4
      %v699 = vrot.slane %v660, 5
      %v700 = vsel %vm542, %v698, %v699
      %v701 = vrot.slane %v699, 4
      %v702 = vrot.slane %v661, 5
      %v703 = vsel %vm542, %v701, %v702
      %v704 = vrot.slane %v702, 4
      %v705 = vrot.slane %v662, 5
      %v706 = vsel %vm542, %v704, %v705
      %v707 = vrot.slane %v705, 4
      %v708 = vrot.slane %v663, 5
      %v709 = vsel %vm542, %v707, %v708
      %v710 = vrot.slane %v708, 4
      %v711 = vrot.slane %v664, 5
      %v712 = vsel %vm542, %v710, %v711
      %v713 = vrot.slane %v711, 4
      %v714 = vrot.slane %v665, 5
      %v715 = vsel %vm542, %v713, %v714
      %v716 = vrot.slane %v714, 4
      %v717 = vrot.slane %v666, 5
      %v718 = vsel %vm542, %v716, %v717
      %v719 = vrot.slane %v717, 4
      %v720 = vrot.slane %v667, 5
      %v721 = vsel %vm542, %v719, %v720
      %v722 = vrot.slane %v720, 4
      %v723 = vrot.slane %v668, 5
      %v724 = vsel %vm542, %v722, %v723
      %v725 = vrot.slane %v723, 4
      %v726 = vrot.slane %v669, 5
      %v727 = vsel %vm542, %v725, %v726
      %v728 = vrot.slane %v726, 4
      %v729 = vrot.slane %v670, 5
      %v730 = vsel %vm542, %v728, %v729
      %v731 = vrot.slane %v729, 4
      %v732 = vrot.slane %v671, 5
      %v733 = vsel %vm542, %v731, %v732
      %v734 = vrot.slane %v732, 4
      %v735 = vrot.slane %v672, 5
      %v736 = vsel %vm542, %v734, %v735
      %v737 = vrot.slane %v735, 4
      %v738 = vrot.slane %v673, 5
      %v739 = vsel %vm542, %v737, %v738
      %740 = vrot.lane.b32.xlu0 %v694, 12
      %v741 = vpop.permute.xlu0 %740
      %742 = vrot.lane.b32.xlu0 %v697, 12
      %v743 = vpop.permute.xlu0 %742
      %744 = vrot.lane.b32.xlu0 %v700, 12
      %v745 = vpop.permute.xlu0 %744
      %746 = vrot.lane.b32.xlu0 %v703, 12
      %v747 = vpop.permute.xlu0 %746
      %748 = vrot.lane.b32.xlu0 %v706, 12
      %v749 = vpop.permute.xlu0 %748
      %750 = vrot.lane.b32.xlu0 %v709, 12
      %v751 = vpop.permute.xlu0 %750
      %752 = vrot.lane.b32.xlu0 %v712, 12
      %v753 = vpop.permute.xlu0 %752
      %754 = vrot.lane.b32.xlu0 %v715, 12
      %v755 = vpop.permute.xlu0 %754
      %756 = vrot.lane.b32.xlu0 %v718, 12
      %v757 = vpop.permute.xlu0 %756
      %758 = vrot.lane.b32.xlu0 %v721, 12
      %v759 = vpop.permute.xlu0 %758
      %760 = vrot.lane.b32.xlu0 %v724, 12
      %v761 = vpop.permute.xlu0 %760
      %762 = vrot.lane.b32.xlu0 %v727, 12
      %v763 = vpop.permute.xlu0 %762
      %764 = vrot.lane.b32.xlu0 %v730, 12
      %v765 = vpop.permute.xlu0 %764
      %766 = vrot.lane.b32.xlu0 %v733, 12
      %v767 = vpop.permute.xlu0 %766
      %768 = vrot.lane.b32.xlu0 %v736, 12
      %v769 = vpop.permute.xlu0 %768
      %770 = vrot.lane.b32.xlu0 %v739, 12
      %v771 = vpop.permute.xlu0 %770
      %vm788 = vcmask 126048
      %789 = vst.msk [vmem:[#allocation3] sm:$0xf] %vm788, %v741
      %790 = vst.msk [vmem:[#allocation3 + $0x4] sm:$0xf] %vm788, %v743
      %791 = vst.msk [vmem:[#allocation3 + $0x8] sm:$0xf] %vm788, %v745
      %792 = vst.msk [vmem:[#allocation3 + $0xc] sm:$0xf] %vm788, %v747
      %793 = vst.msk [vmem:[#allocation3 + $0x10] sm:$0xf] %vm788, %v749
      %794 = vst.msk [vmem:[#allocation3 + $0x14] sm:$0xf] %vm788, %v751
      %795 = vst.msk [vmem:[#allocation3 + $0x18] sm:$0xf] %vm788, %v753
      %796 = vst.msk [vmem:[#allocation3 + $0x1c] sm:$0xf] %vm788, %v755
      %797 = vst.msk [vmem:[#allocation3 + $0x20] sm:$0xf] %vm788, %v757
      %798 = vst.msk [vmem:[#allocation3 + $0x24] sm:$0xf] %vm788, %v759
      %799 = vst.msk [vmem:[#allocation3 + $0x28] sm:$0xf] %vm788, %v761
      %800 = vst.msk [vmem:[#allocation3 + $0x2c] sm:$0xf] %vm788, %v763
      %801 = vst.msk [vmem:[#allocation3 + $0x30] sm:$0xf] %vm788, %v765
      %802 = vst.msk [vmem:[#allocation3 + $0x34] sm:$0xf] %vm788, %v767
      %803 = vst.msk [vmem:[#allocation3 + $0x38] sm:$0xf] %vm788, %v769
      %804 = vst.msk [vmem:[#allocation3 + $0x3c] sm:$0xf] %vm788, %v771
      %v805 = vld [vmem:[%s183 + $0x4] sm:$0xe]
      %v806 = vld [vmem:[%s183 + $0x8] sm:$0xf]
      %v807 = vld [vmem:[%s183 + $0xc] sm:$0xf]
      %v808 = vld [vmem:[%s183 + $0x10] sm:$0xf]
      %v809 = vld [vmem:[%s183 + $0x14] sm:$0xf]
      %v810 = vld [vmem:[%s183 + $0x18] sm:$0xf]
      %v811 = vld [vmem:[%s183 + $0x1c] sm:$0xf]
      %v812 = vld [vmem:[%s183 + $0x20] sm:$0xf]
      %v813 = vld [vmem:[%s183 + $0x24] sm:$0xf]
      %v814 = vld [vmem:[%s183 + $0x28] sm:$0xf]
      %v815 = vld [vmem:[%s183 + $0x2c] sm:$0xf]
      %v816 = vld [vmem:[%s183 + $0x30] sm:$0xf]
      %v817 = vld [vmem:[%s183 + $0x34] sm:$0xf]
      %v818 = vld [vmem:[%s183 + $0x38] sm:$0xf]
      %v819 = vld [vmem:[%s183 + $0x3c] sm:$0xf]
      %v820 = vld [vmem:[%s183 + $0x40] sm:$0xf]
      %v821 = vld [vmem:[%s183 + $0x44] sm:$0x3]
      %vm822 = vsmask.f32 2304
      %vm823 = vsmask.f32 6416
      %vm824 = vmor %vm822, %vm823
      %v826 = vshrl.u32 %v805, 16
      %v828 = vrot.slane %v826, 5
      %v829 = vshll.u32 %v805, 16
      %v831 = vrot.slane %v829, 6
      %v832 = vor.u32 %v828, %v831
      %v833 = vrot.slane %v832, 4
      %v835 = vshrl.u32 %v806, 16
      %v837 = vrot.slane %v835, 5
      %v838 = vshll.u32 %v806, 16
      %v840 = vrot.slane %v838, 6
      %v841 = vor.u32 %v837, %v840
      %v842 = vsel %vm824, %v833, %v841
      %v843 = vrot.slane %v841, 4
      %v845 = vshrl.u32 %v807, 16
      %v847 = vrot.slane %v845, 5
      %v848 = vshll.u32 %v807, 16
      %v850 = vrot.slane %v848, 6
      %v851 = vor.u32 %v847, %v850
      %v852 = vsel %vm824, %v843, %v851
      %v853 = vrot.slane %v851, 4
      %v855 = vshrl.u32 %v808, 16
      %v857 = vrot.slane %v855, 5
      %v858 = vshll.u32 %v808, 16
      %v860 = vrot.slane %v858, 6
      %v861 = vor.u32 %v857, %v860
      %v862 = vsel %vm824, %v853, %v861
      %v863 = vrot.slane %v861, 4
      %v865 = vshrl.u32 %v809, 16
      %v867 = vrot.slane %v865, 5
      %v868 = vshll.u32 %v809, 16
      %v870 = vrot.slane %v868, 6
      %v871 = vor.u32 %v867, %v870
      %v872 = vsel %vm824, %v863, %v871
      %v873 = vrot.slane %v871, 4
      %v875 = vshrl.u32 %v810, 16
      %v877 = vrot.slane %v875, 5
      %v878 = vshll.u32 %v810, 16
      %v880 = vrot.slane %v878, 6
      %v881 = vor.u32 %v877, %v880
      %v882 = vsel %vm824, %v873, %v881
      %v883 = vrot.slane %v881, 4
      %v885 = vshrl.u32 %v811, 16
      %v887 = vrot.slane %v885, 5
      %v888 = vshll.u32 %v811, 16
      %v890 = vrot.slane %v888, 6
      %v891 = vor.u32 %v887, %v890
      %v892 = vsel %vm824, %v883, %v891
      %v893 = vrot.slane %v891, 4
      %v895 = vshrl.u32 %v812, 16
      %v897 = vrot.slane %v895, 5
      %v898 = vshll.u32 %v812, 16
      %v900 = vrot.slane %v898, 6
      %v901 = vor.u32 %v897, %v900
      %v902 = vsel %vm824, %v893, %v901
      %v903 = vrot.slane %v901, 4
      %v905 = vshrl.u32 %v813, 16
      %v907 = vrot.slane %v905, 5
      %v908 = vshll.u32 %v813, 16
      %v910 = vrot.slane %v908, 6
      %v911 = vor.u32 %v907, %v910
      %v912 = vsel %vm824, %v903, %v911
      %v913 = vrot.slane %v911, 4
      %v915 = vshrl.u32 %v814, 16
      %v917 = vrot.slane %v915, 5
      %v918 = vshll.u32 %v814, 16
      %v920 = vrot.slane %v918, 6
      %v921 = vor.u32 %v917, %v920
      %v922 = vsel %vm824, %v913, %v921
      %v923 = vrot.slane %v921, 4
      %v925 = vshrl.u32 %v815, 16
      %v927 = vrot.slane %v925, 5
      %v928 = vshll.u32 %v815, 16
      %v930 = vrot.slane %v928, 6
      %v931 = vor.u32 %v927, %v930
      %v932 = vsel %vm824, %v923, %v931
      %v933 = vrot.slane %v931, 4
      %v935 = vshrl.u32 %v816, 16
      %v937 = vrot.slane %v935, 5
      %v938 = vshll.u32 %v816, 16
      %v940 = vrot.slane %v938, 6
      %v941 = vor.u32 %v937, %v940
      %v942 = vsel %vm824, %v933, %v941
      %v943 = vrot.slane %v941, 4
      %v945 = vshrl.u32 %v817, 16
      %v947 = vrot.slane %v945, 5
      %v948 = vshll.u32 %v817, 16
      %v950 = vrot.slane %v948, 6
      %v951 = vor.u32 %v947, %v950
      %v952 = vsel %vm824, %v943, %v951
      %v953 = vrot.slane %v951, 4
      %v955 = vshrl.u32 %v818, 16
      %v957 = vrot.slane %v955, 5
      %v958 = vshll.u32 %v818, 16
      %v960 = vrot.slane %v958, 6
      %v961 = vor.u32 %v957, %v960
      %v962 = vsel %vm824, %v953, %v961
      %v963 = vrot.slane %v961, 4
      %v965 = vshrl.u32 %v819, 16
      %v967 = vrot.slane %v965, 5
      %v968 = vshll.u32 %v819, 16
      %v970 = vrot.slane %v968, 6
      %v971 = vor.u32 %v967, %v970
      %v972 = vsel %vm824, %v963, %v971
      %v973 = vrot.slane %v971, 4
      %v975 = vshrl.u32 %v820, 16
      %v977 = vrot.slane %v975, 5
      %v978 = vshll.u32 %v820, 16
      %v980 = vrot.slane %v978, 6
      %v981 = vor.u32 %v977, %v980
      %v982 = vsel %vm824, %v973, %v981
      %v983 = vrot.slane %v981, 4
      %v985 = vshrl.u32 %v821, 16
      %v987 = vrot.slane %v985, 5
      %v988 = vshll.u32 %v821, 16
      %v990 = vrot.slane %v988, 6
      %v991 = vor.u32 %v987, %v990
      %v992 = vsel %vm824, %v983, %v991
      %993 = vrot.lane.b32.xlu0 %v842, 16
      %v994 = vpop.permute.xlu0 %993
      %995 = vrot.lane.b32.xlu0 %v852, 16
      %v996 = vpop.permute.xlu0 %995
      %997 = vrot.lane.b32.xlu0 %v862, 16
      %v998 = vpop.permute.xlu0 %997
      %999 = vrot.lane.b32.xlu0 %v872, 16
      %v1000 = vpop.permute.xlu0 %999
      %1001 = vrot.lane.b32.xlu0 %v882, 16
      %v1002 = vpop.permute.xlu0 %1001
      %1003 = vrot.lane.b32.xlu0 %v892, 16
      %v1004 = vpop.permute.xlu0 %1003
      %1005 = vrot.lane.b32.xlu0 %v902, 16
      %v1006 = vpop.permute.xlu0 %1005
      %1007 = vrot.lane.b32.xlu0 %v912, 16
      %v1008 = vpop.permute.xlu0 %1007
      %1009 = vrot.lane.b32.xlu0 %v922, 16
      %v1010 = vpop.permute.xlu0 %1009
      %1011 = vrot.lane.b32.xlu0 %v932, 16
      %v1012 = vpop.permute.xlu0 %1011
      %1013 = vrot.lane.b32.xlu0 %v942, 16
      %v1014 = vpop.permute.xlu0 %1013
      %1015 = vrot.lane.b32.xlu0 %v952, 16
      %v1016 = vpop.permute.xlu0 %1015
      %1017 = vrot.lane.b32.xlu0 %v962, 16
      %v1018 = vpop.permute.xlu0 %1017
      %1019 = vrot.lane.b32.xlu0 %v972, 16
      %v1020 = vpop.permute.xlu0 %1019
      %1021 = vrot.lane.b32.xlu0 %v982, 16
      %v1022 = vpop.permute.xlu0 %1021
      %1023 = vrot.lane.b32.xlu0 %v992, 16
      %v1024 = vpop.permute.xlu0 %1023
      %vm1041 = vcmask 158848
      %1042 = vst.msk [vmem:[#allocation3] sm:$0xf] %vm1041, %v994
      %1043 = vst.msk [vmem:[#allocation3 + $0x4] sm:$0xf] %vm1041, %v996
      %1044 = vst.msk [vmem:[#allocation3 + $0x8] sm:$0xf] %vm1041, %v998
      %1045 = vst.msk [vmem:[#allocation3 + $0xc] sm:$0xf] %vm1041, %v1000
      %1046 = vst.msk [vmem:[#allocation3 + $0x10] sm:$0xf] %vm1041, %v1002
      %1047 = vst.msk [vmem:[#allocation3 + $0x14] sm:$0xf] %vm1041, %v1004
      %1048 = vst.msk [vmem:[#allocation3 + $0x18] sm:$0xf] %vm1041, %v1006
      %1049 = vst.msk [vmem:[#allocation3 + $0x1c] sm:$0xf] %vm1041, %v1008
      %1050 = vst.msk [vmem:[#allocation3 + $0x20] sm:$0xf] %vm1041, %v1010
      %1051 = vst.msk [vmem:[#allocation3 + $0x24] sm:$0xf] %vm1041, %v1012
      %1052 = vst.msk [vmem:[#allocation3 + $0x28] sm:$0xf] %vm1041, %v1014
      %1053 = vst.msk [vmem:[#allocation3 + $0x2c] sm:$0xf] %vm1041, %v1016
      %1054 = vst.msk [vmem:[#allocation3 + $0x30] sm:$0xf] %vm1041, %v1018
      %1055 = vst.msk [vmem:[#allocation3 + $0x34] sm:$0xf] %vm1041, %v1020
      %1056 = vst.msk [vmem:[#allocation3 + $0x38] sm:$0xf] %vm1041, %v1022
      %1057 = vst.msk [vmem:[#allocation3 + $0x3c] sm:$0xf] %vm1041, %v1024
      %v1058 = vld [vmem:[%s183 + $0x4] sm:$0xc]
      %v1059 = vld [vmem:[%s183 + $0x8] sm:$0xf]
      %v1060 = vld [vmem:[%s183 + $0xc] sm:$0xf]
      %v1061 = vld [vmem:[%s183 + $0x10] sm:$0xf]
      %v1062 = vld [vmem:[%s183 + $0x14] sm:$0xf]
      %v1063 = vld [vmem:[%s183 + $0x18] sm:$0xf]
      %v1064 = vld [vmem:[%s183 + $0x1c] sm:$0xf]
      %v1065 = vld [vmem:[%s183 + $0x20] sm:$0xf]
      %v1066 = vld [vmem:[%s183 + $0x24] sm:$0xf]
      %v1067 = vld [vmem:[%s183 + $0x28] sm:$0xf]
      %v1068 = vld [vmem:[%s183 + $0x2c] sm:$0xf]
      %v1069 = vld [vmem:[%s183 + $0x30] sm:$0xf]
      %v1070 = vld [vmem:[%s183 + $0x34] sm:$0xf]
      %v1071 = vld [vmem:[%s183 + $0x38] sm:$0xf]
      %v1072 = vld [vmem:[%s183 + $0x3c] sm:$0xf]
      %v1073 = vld [vmem:[%s183 + $0x40] sm:$0xf]
      %v1074 = vld [vmem:[%s183 + $0x44] sm:$0x3]
      %vm1092 = vcmask 1041408
      %vm1093 = vcmask 1045508
      %vm1094 = vmor %vm1092, %vm1093
      %v1095 = vrot.slane %v1058, 6
      %v1096 = vrot.slane %v1095, 4
      %v1097 = vrot.slane %v1059, 6
      %v1098 = vsel %vm1094, %v1096, %v1097
      %v1099 = vrot.slane %v1097, 4
      %v1100 = vrot.slane %v1060, 6
      %v1101 = vsel %vm1094, %v1099, %v1100
      %v1102 = vrot.slane %v1100, 4
      %v1103 = vrot.slane %v1061, 6
      %v1104 = vsel %vm1094, %v1102, %v1103
      %v1105 = vrot.slane %v1103, 4
      %v1106 = vrot.slane %v1062, 6
      %v1107 = vsel %vm1094, %v1105, %v1106
      %v1108 = vrot.slane %v1106, 4
      %v1109 = vrot.slane %v1063, 6
      %v1110 = vsel %vm1094, %v1108, %v1109
      %v1111 = vrot.slane %v1109, 4
      %v1112 = vrot.slane %v1064, 6
      %v1113 = vsel %vm1094, %v1111, %v1112
      %v1114 = vrot.slane %v1112, 4
      %v1115 = vrot.slane %v1065, 6
      %v1116 = vsel %vm1094, %v1114, %v1115
      %v1117 = vrot.slane %v1115, 4
      %v1118 = vrot.slane %v1066, 6
      %v1119 = vsel %vm1094, %v1117, %v1118
      %v1120 = vrot.slane %v1118, 4
      %v1121 = vrot.slane %v1067, 6
      %v1122 = vsel %vm1094, %v1120, %v1121
      %v1123 = vrot.slane %v1121, 4
      %v1124 = vrot.slane %v1068, 6
      %v1125 = vsel %vm1094, %v1123, %v1124
      %v1126 = vrot.slane %v1124, 4
      %v1127 = vrot.slane %v1069, 6
      %v1128 = vsel %vm1094, %v1126, %v1127
      %v1129 = vrot.slane %v1127, 4
      %v1130 = vrot.slane %v1070, 6
      %v1131 = vsel %vm1094, %v1129, %v1130
      %v1132 = vrot.slane %v1130, 4
      %v1133 = vrot.slane %v1071, 6
      %v1134 = vsel %vm1094, %v1132, %v1133
      %v1135 = vrot.slane %v1133, 4
      %v1136 = vrot.slane %v1072, 6
      %v1137 = vsel %vm1094, %v1135, %v1136
      %v1138 = vrot.slane %v1136, 4
      %v1139 = vrot.slane %v1073, 6
      %v1140 = vsel %vm1094, %v1138, %v1139
      %v1141 = vrot.slane %v1139, 4
      %v1142 = vrot.slane %v1074, 6
      %v1143 = vsel %vm1094, %v1141, %v1142
      %1144 = vrot.lane.b32.xlu0 %v1098, 20
      %v1145 = vpop.permute.xlu0 %1144
      %1146 = vrot.lane.b32.xlu0 %v1101, 20
      %v1147 = vpop.permute.xlu0 %1146
      %1148 = vrot.lane.b32.xlu0 %v1104, 20
      %v1149 = vpop.permute.xlu0 %1148
      %1150 = vrot.lane.b32.xlu0 %v1107, 20
      %v1151 = vpop.permute.xlu0 %1150
      %1152 = vrot.lane.b32.xlu0 %v1110, 20
      %v1153 = vpop.permute.xlu0 %1152
      %1154 = vrot.lane.b32.xlu0 %v1113, 20
      %v1155 = vpop.permute.xlu0 %1154
      %1156 = vrot.lane.b32.xlu0 %v1116, 20
      %v1157 = vpop.permute.xlu0 %1156
      %1158 = vrot.lane.b32.xlu0 %v1119, 20
      %v1159 = vpop.permute.xlu0 %1158
      %1160 = vrot.lane.b32.xlu0 %v1122, 20
      %v1161 = vpop.permute.xlu0 %1160
      %1162 = vrot.lane.b32.xlu0 %v1125, 20
      %v1163 = vpop.permute.xlu0 %1162
      %1164 = vrot.lane.b32.xlu0 %v1128, 20
      %v1165 = vpop.permute.xlu0 %1164
      %1166 = vrot.lane.b32.xlu0 %v1131, 20
      %v1167 = vpop.permute.xlu0 %1166
      %1168 = vrot.lane.b32.xlu0 %v1134, 20
      %v1169 = vpop.permute.xlu0 %1168
      %1170 = vrot.lane.b32.xlu0 %v1137, 20
      %v1171 = vpop.permute.xlu0 %1170
      %1172 = vrot.lane.b32.xlu0 %v1140, 20
      %v1173 = vpop.permute.xlu0 %1172
      %1174 = vrot.lane.b32.xlu0 %v1143, 20
      %v1175 = vpop.permute.xlu0 %1174
      %vm1192 = vcmask 191648
      %1193 = vst.msk [vmem:[#allocation3] sm:$0xf] %vm1192, %v1145
      %1194 = vst.msk [vmem:[#allocation3 + $0x4] sm:$0xf] %vm1192, %v1147
      %1195 = vst.msk [vmem:[#allocation3 + $0x8] sm:$0xf] %vm1192, %v1149
      %1196 = vst.msk [vmem:[#allocation3 + $0xc] sm:$0xf] %vm1192, %v1151
      %1197 = vst.msk [vmem:[#allocation3 + $0x10] sm:$0xf] %vm1192, %v1153
      %1198 = vst.msk [vmem:[#allocation3 + $0x14] sm:$0xf] %vm1192, %v1155
      %1199 = vst.msk [vmem:[#allocation3 + $0x18] sm:$0xf] %vm1192, %v1157
      %1200 = vst.msk [vmem:[#allocation3 + $0x1c] sm:$0xf] %vm1192, %v1159
      %1201 = vst.msk [vmem:[#allocation3 + $0x20] sm:$0xf] %vm1192, %v1161
      %1202 = vst.msk [vmem:[#allocation3 + $0x24] sm:$0xf] %vm1192, %v1163
      %1203 = vst.msk [vmem:[#allocation3 + $0x28] sm:$0xf] %vm1192, %v1165
      %1204 = vst.msk [vmem:[#allocation3 + $0x2c] sm:$0xf] %vm1192, %v1167
      %1205 = vst.msk [vmem:[#allocation3 + $0x30] sm:$0xf] %vm1192, %v1169
      %1206 = vst.msk [vmem:[#allocation3 + $0x34] sm:$0xf] %vm1192, %v1171
      %1207 = vst.msk [vmem:[#allocation3 + $0x38] sm:$0xf] %vm1192, %v1173
      %1208 = vst.msk [vmem:[#allocation3 + $0x3c] sm:$0xf] %vm1192, %v1175
      %v1209 = vld [vmem:[%s183 + $0x8] sm:$0xc]
      %v1210 = vld [vmem:[%s183 + $0xc] sm:$0xf]
      %v1211 = vld [vmem:[%s183 + $0x10] sm:$0xf]
      %v1212 = vld [vmem:[%s183 + $0x14] sm:$0xf]
      %v1213 = vld [vmem:[%s183 + $0x18] sm:$0xf]
      %v1214 = vld [vmem:[%s183 + $0x1c] sm:$0xf]
      %v1215 = vld [vmem:[%s183 + $0x20] sm:$0xf]
      %v1216 = vld [vmem:[%s183 + $0x24] sm:$0xf]
      %v1217 = vld [vmem:[%s183 + $0x28] sm:$0xf]
      %v1218 = vld [vmem:[%s183 + $0x2c] sm:$0xf]
      %v1219 = vld [vmem:[%s183 + $0x30] sm:$0xf]
      %v1220 = vld [vmem:[%s183 + $0x34] sm:$0xf]
      %v1221 = vld [vmem:[%s183 + $0x38] sm:$0xf]
      %v1222 = vld [vmem:[%s183 + $0x3c] sm:$0xf]
      %v1223 = vld [vmem:[%s183 + $0x40] sm:$0xf]
      %v1224 = vld [vmem:[%s183 + $0x44] sm:$0xf]
      %v1225 = vld [vmem:[%s183 + $0x48] sm:$0x3]
      %v1243 = vrot.slane %v1209, 6
      %v1244 = vrot.slane %v1243, 4
      %v1245 = vrot.slane %v1210, 6
      %v1246 = vsel %vm1094, %v1244, %v1245
      %v1247 = vrot.slane %v1245, 4
      %v1248 = vrot.slane %v1211, 6
      %v1249 = vsel %vm1094, %v1247, %v1248
      %v1250 = vrot.slane %v1248, 4
      %v1251 = vrot.slane %v1212, 6
      %v1252 = vsel %vm1094, %v1250, %v1251
      %v1253 = vrot.slane %v1251, 4
      %v1254 = vrot.slane %v1213, 6
      %v1255 = vsel %vm1094, %v1253, %v1254
      %v1256 = vrot.slane %v1254, 4
      %v1257 = vrot.slane %v1214, 6
      %v1258 = vsel %vm1094, %v1256, %v1257
      %v1259 = vrot.slane %v1257, 4
      %v1260 = vrot.slane %v1215, 6
      %v1261 = vsel %vm1094, %v1259, %v1260
      %v1262 = vrot.slane %v1260, 4
      %v1263 = vrot.slane %v1216, 6
      %v1264 = vsel %vm1094, %v1262, %v1263
      %v1265 = vrot.slane %v1263, 4
      %v1266 = vrot.slane %v1217, 6
      %v1267 = vsel %vm1094, %v1265, %v1266
      %v1268 = vrot.slane %v1266, 4
      %v1269 = vrot.slane %v1218, 6
      %v1270 = vsel %vm1094, %v1268, %v1269
      %v1271 = vrot.slane %v1269, 4
      %v1272 = vrot.slane %v1219, 6
      %v1273 = vsel %vm1094, %v1271, %v1272
      %v1274 = vrot.slane %v1272, 4
      %v1275 = vrot.slane %v1220, 6
      %v1276 = vsel %vm1094, %v1274, %v1275
      %v1277 = vrot.slane %v1275, 4
      %v1278 = vrot.slane %v1221, 6
      %v1279 = vsel %vm1094, %v1277, %v1278
      %v1280 = vrot.slane %v1278, 4
      %v1281 = vrot.slane %v1222, 6
      %v1282 = vsel %vm1094, %v1280, %v1281
      %v1283 = vrot.slane %v1281, 4
      %v1284 = vrot.slane %v1223, 6
      %v1285 = vsel %vm1094, %v1283, %v1284
      %v1286 = vrot.slane %v1284, 4
      %v1287 = vrot.slane %v1224, 6
      %v1288 = vsel %vm1094, %v1286, %v1287
      %v1289 = vrot.slane %v1287, 4
      %v1290 = vrot.slane %v1225, 6
      %v1291 = vsel %vm1094, %v1289, %v1290
      %1292 = vrot.lane.b32.xlu0 %v1246, 24
      %v1293 = vpop.permute.xlu0 %1292
      %1294 = vrot.lane.b32.xlu0 %v1249, 24
      %v1295 = vpop.permute.xlu0 %1294
      %1296 = vrot.lane.b32.xlu0 %v1252, 24
      %v1297 = vpop.permute.xlu0 %1296
      %1298 = vrot.lane.b32.xlu0 %v1255, 24
      %v1299 = vpop.permute.xlu0 %1298
      %1300 = vrot.lane.b32.xlu0 %v1258, 24
      %v1301 = vpop.permute.xlu0 %1300
      %1302 = vrot.lane.b32.xlu0 %v1261, 24
      %v1303 = vpop.permute.xlu0 %1302
      %1304 = vrot.lane.b32.xlu0 %v1264, 24
      %v1305 = vpop.permute.xlu0 %1304
      %1306 = vrot.lane.b32.xlu0 %v1267, 24
      %v1307 = vpop.permute.xlu0 %1306
      %1308 = vrot.lane.b32.xlu0 %v1270, 24
      %v1309 = vpop.permute.xlu0 %1308
      %1310 = vrot.lane.b32.xlu0 %v1273, 24
      %v1311 = vpop.permute.xlu0 %1310
      %1312 = vrot.lane.b32.xlu0 %v1276, 24
      %v1313 = vpop.permute.xlu0 %1312
      %1314 = vrot.lane.b32.xlu0 %v1279, 24
      %v1315 = vpop.permute.xlu0 %1314
      %1316 = vrot.lane.b32.xlu0 %v1282, 24
      %v1317 = vpop.permute.xlu0 %1316
      %1318 = vrot.lane.b32.xlu0 %v1285, 24
      %v1319 = vpop.permute.xlu0 %1318
      %1320 = vrot.lane.b32.xlu0 %v1288, 24
      %v1321 = vpop.permute.xlu0 %1320
      %1322 = vrot.lane.b32.xlu0 %v1291, 24
      %v1323 = vpop.permute.xlu0 %1322
      %vm1340 = vcmask 224448
      %1341 = vst.msk [vmem:[#allocation3] sm:$0xf] %vm1340, %v1293
      %1342 = vst.msk [vmem:[#allocation3 + $0x4] sm:$0xf] %vm1340, %v1295
      %1343 = vst.msk [vmem:[#allocation3 + $0x8] sm:$0xf] %vm1340, %v1297
      %1344 = vst.msk [vmem:[#allocation3 + $0xc] sm:$0xf] %vm1340, %v1299
      %1345 = vst.msk [vmem:[#allocation3 + $0x10] sm:$0xf] %vm1340, %v1301
      %1346 = vst.msk [vmem:[#allocation3 + $0x14] sm:$0xf] %vm1340, %v1303
      %1347 = vst.msk [vmem:[#allocation3 + $0x18] sm:$0xf] %vm1340, %v1305
      %1348 = vst.msk [vmem:[#allocation3 + $0x1c] sm:$0xf] %vm1340, %v1307
      %1349 = vst.msk [vmem:[#allocation3 + $0x20] sm:$0xf] %vm1340, %v1309
      %1350 = vst.msk [vmem:[#allocation3 + $0x24] sm:$0xf] %vm1340, %v1311
      %1351 = vst.msk [vmem:[#allocation3 + $0x28] sm:$0xf] %vm1340, %v1313
      %1352 = vst.msk [vmem:[#allocation3 + $0x2c] sm:$0xf] %vm1340, %v1315
      %1353 = vst.msk [vmem:[#allocation3 + $0x30] sm:$0xf] %vm1340, %v1317
      %1354 = vst.msk [vmem:[#allocation3 + $0x34] sm:$0xf] %vm1340, %v1319
      %1355 = vst.msk [vmem:[#allocation3 + $0x38] sm:$0xf] %vm1340, %v1321
      %1356 = vst.msk [vmem:[#allocation3 + $0x3c] sm:$0xf] %vm1340, %v1323
      %v1357 = vld [vmem:[%s183 + $0x8] sm:$0xc]
      %v1358 = vld [vmem:[%s183 + $0xc] sm:$0xf]
      %v1359 = vld [vmem:[%s183 + $0x10] sm:$0xf]
      %v1360 = vld [vmem:[%s183 + $0x14] sm:$0xf]
      %v1361 = vld [vmem:[%s183 + $0x18] sm:$0xf]
      %v1362 = vld [vmem:[%s183 + $0x1c] sm:$0xf]
      %v1363 = vld [vmem:[%s183 + $0x20] sm:$0xf]
      %v1364 = vld [vmem:[%s183 + $0x24] sm:$0xf]
      %v1365 = vld [vmem:[%s183 + $0x28] sm:$0xf]
      %v1366 = vld [vmem:[%s183 + $0x2c] sm:$0xf]
      %v1367 = vld [vmem:[%s183 + $0x30] sm:$0xf]
      %v1368 = vld [vmem:[%s183 + $0x34] sm:$0xf]
      %v1369 = vld [vmem:[%s183 + $0x38] sm:$0xf]
      %v1370 = vld [vmem:[%s183 + $0x3c] sm:$0xf]
      %v1371 = vld [vmem:[%s183 + $0x40] sm:$0xf]
      %v1372 = vld [vmem:[%s183 + $0x44] sm:$0xf]
      %v1373 = vld [vmem:[%s183 + $0x48] sm:$0x7]
      %vm1374 = vsmask.f32 1280
      %vm1375 = vsmask.f32 5392
      %vm1376 = vmor %vm1374, %vm1375
      %v1378 = vshrl.u32 %v1357, 16
      %v1380 = vrot.slane %v1378, 6
      %v1381 = vshll.u32 %v1357, 16
      %v1383 = vrot.slane %v1381, 7
      %v1384 = vor.u32 %v1380, %v1383
      %v1385 = vrot.slane %v1384, 4
      %v1387 = vshrl.u32 %v1358, 16
      %v1389 = vrot.slane %v1387, 6
      %v1390 = vshll.u32 %v1358, 16
      %v1392 = vrot.slane %v1390, 7
      %v1393 = vor.u32 %v1389, %v1392
      %v1394 = vsel %vm1376, %v1385, %v1393
      %v1395 = vrot.slane %v1393, 4
      %v1397 = vshrl.u32 %v1359, 16
      %v1399 = vrot.slane %v1397, 6
      %v1400 = vshll.u32 %v1359, 16
      %v1402 = vrot.slane %v1400, 7
      %v1403 = vor.u32 %v1399, %v1402
      %v1404 = vsel %vm1376, %v1395, %v1403
      %v1405 = vrot.slane %v1403, 4
      %v1407 = vshrl.u32 %v1360, 16
      %v1409 = vrot.slane %v1407, 6
      %v1410 = vshll.u32 %v1360, 16
      %v1412 = vrot.slane %v1410, 7
      %v1413 = vor.u32 %v1409, %v1412
      %v1414 = vsel %vm1376, %v1405, %v1413
      %v1415 = vrot.slane %v1413, 4
      %v1417 = vshrl.u32 %v1361, 16
      %v1419 = vrot.slane %v1417, 6
      %v1420 = vshll.u32 %v1361, 16
      %v1422 = vrot.slane %v1420, 7
      %v1423 = vor.u32 %v1419, %v1422
      %v1424 = vsel %vm1376, %v1415, %v1423
      %v1425 = vrot.slane %v1423, 4
      %v1427 = vshrl.u32 %v1362, 16
      %v1429 = vrot.slane %v1427, 6
      %v1430 = vshll.u32 %v1362, 16
      %v1432 = vrot.slane %v1430, 7
      %v1433 = vor.u32 %v1429, %v1432
      %v1434 = vsel %vm1376, %v1425, %v1433
      %v1435 = vrot.slane %v1433, 4
      %v1437 = vshrl.u32 %v1363, 16
      %v1439 = vrot.slane %v1437, 6
      %v1440 = vshll.u32 %v1363, 16
      %v1442 = vrot.slane %v1440, 7
      %v1443 = vor.u32 %v1439, %v1442
      %v1444 = vsel %vm1376, %v1435, %v1443
      %v1445 = vrot.slane %v1443, 4
      %v1447 = vshrl.u32 %v1364, 16
      %v1449 = vrot.slane %v1447, 6
      %v1450 = vshll.u32 %v1364, 16
      %v1452 = vrot.slane %v1450, 7
      %v1453 = vor.u32 %v1449, %v1452
      %v1454 = vsel %vm1376, %v1445, %v1453
      %v1455 = vrot.slane %v1453, 4
      %v1457 = vshrl.u32 %v1365, 16
      %v1459 = vrot.slane %v1457, 6
      %v1460 = vshll.u32 %v1365, 16
      %v1462 = vrot.slane %v1460, 7
      %v1463 = vor.u32 %v1459, %v1462
      %v1464 = vsel %vm1376, %v1455, %v1463
      %v1465 = vrot.slane %v1463, 4
      %v1467 = vshrl.u32 %v1366, 16
      %v1469 = vrot.slane %v1467, 6
      %v1470 = vshll.u32 %v1366, 16
      %v1472 = vrot.slane %v1470, 7
      %v1473 = vor.u32 %v1469, %v1472
      %v1474 = vsel %vm1376, %v1465, %v1473
      %v1475 = vrot.slane %v1473, 4
      %v1477 = vshrl.u32 %v1367, 16
      %v1479 = vrot.slane %v1477, 6
      %v1480 = vshll.u32 %v1367, 16
      %v1482 = vrot.slane %v1480, 7
      %v1483 = vor.u32 %v1479, %v1482
      %v1484 = vsel %vm1376, %v1475, %v1483
      %v1485 = vrot.slane %v1483, 4
      %v1487 = vshrl.u32 %v1368, 16
      %v1489 = vrot.slane %v1487, 6
      %v1490 = vshll.u32 %v1368, 16
      %v1492 = vrot.slane %v1490, 7
      %v1493 = vor.u32 %v1489, %v1492
      %v1494 = vsel %vm1376, %v1485, %v1493
      %v1495 = vrot.slane %v1493, 4
      %v1497 = vshrl.u32 %v1369, 16
      %v1499 = vrot.slane %v1497, 6
      %v1500 = vshll.u32 %v1369, 16
      %v1502 = vrot.slane %v1500, 7
      %v1503 = vor.u32 %v1499, %v1502
      %v1504 = vsel %vm1376, %v1495, %v1503
      %v1505 = vrot.slane %v1503, 4
      %v1507 = vshrl.u32 %v1370, 16
      %v1509 = vrot.slane %v1507, 6
      %v1510 = vshll.u32 %v1370, 16
      %v1512 = vrot.slane %v1510, 7
      %v1513 = vor.u32 %v1509, %v1512
      %v1514 = vsel %vm1376, %v1505, %v1513
      %v1515 = vrot.slane %v1513, 4
      %v1517 = vshrl.u32 %v1371, 16
      %v1519 = vrot.slane %v1517, 6
      %v1520 = vshll.u32 %v1371, 16
      %v1522 = vrot.slane %v1520, 7
      %v1523 = vor.u32 %v1519, %v1522
      %v1524 = vsel %vm1376, %v1515, %v1523
      %v1525 = vrot.slane %v1523, 4
      %v1527 = vshrl.u32 %v1372, 16
      %v1529 = vrot.slane %v1527, 6
      %v1530 = vshll.u32 %v1372, 16
      %v1532 = vrot.slane %v1530, 7
      %v1533 = vor.u32 %v1529, %v1532
      %v1534 = vsel %vm1376, %v1525, %v1533
      %v1535 = vrot.slane %v1533, 4
      %v1537 = vshrl.u32 %v1373, 16
      %v1539 = vrot.slane %v1537, 6
      %v1540 = vshll.u32 %v1373, 16
      %v1542 = vrot.slane %v1540, 7
      %v1543 = vor.u32 %v1539, %v1542
      %v1544 = vsel %vm1376, %v1535, %v1543
      %1545 = vrot.lane.b32.xlu0 %v1394, 28
      %v1546 = vpop.permute.xlu0 %1545
      %1547 = vrot.lane.b32.xlu0 %v1404, 28
      %v1548 = vpop.permute.xlu0 %1547
      %1549 = vrot.lane.b32.xlu0 %v1414, 28
      %v1550 = vpop.permute.xlu0 %1549
      %1551 = vrot.lane.b32.xlu0 %v1424, 28
      %v1552 = vpop.permute.xlu0 %1551
      %1553 = vrot.lane.b32.xlu0 %v1434, 28
      %v1554 = vpop.permute.xlu0 %1553
      %1555 = vrot.lane.b32.xlu0 %v1444, 28
      %v1556 = vpop.permute.xlu0 %1555
      %1557 = vrot.lane.b32.xlu0 %v1454, 28
      %v1558 = vpop.permute.xlu0 %1557
      %1559 = vrot.lane.b32.xlu0 %v1464, 28
      %v1560 = vpop.permute.xlu0 %1559
      %1561 = vrot.lane.b32.xlu0 %v1474, 28
      %v1562 = vpop.permute.xlu0 %1561
      %1563 = vrot.lane.b32.xlu0 %v1484, 28
      %v1564 = vpop.permute.xlu0 %1563
      %1565 = vrot.lane.b32.xlu0 %v1494, 28
      %v1566 = vpop.permute.xlu0 %1565
      %1567 = vrot.lane.b32.xlu0 %v1504, 28
      %v1568 = vpop.permute.xlu0 %1567
      %1569 = vrot.lane.b32.xlu0 %v1514, 28
      %v1570 = vpop.permute.xlu0 %1569
      %1571 = vrot.lane.b32.xlu0 %v1524, 28
      %v1572 = vpop.permute.xlu0 %1571
      %1573 = vrot.lane.b32.xlu0 %v1534, 28
      %v1574 = vpop.permute.xlu0 %1573
      %1575 = vrot.lane.b32.xlu0 %v1544, 28
      %v1576 = vpop.permute.xlu0 %1575
      %vm1593 = vcmask 257248
      %1594 = vst.msk [vmem:[#allocation3] sm:$0xf] %vm1593, %v1546
      %1595 = vst.msk [vmem:[#allocation3 + $0x4] sm:$0xf] %vm1593, %v1548
      %1596 = vst.msk [vmem:[#allocation3 + $0x8] sm:$0xf] %vm1593, %v1550
      %1597 = vst.msk [vmem:[#allocation3 + $0xc] sm:$0xf] %vm1593, %v1552
      %1598 = vst.msk [vmem:[#allocation3 + $0x10] sm:$0xf] %vm1593, %v1554
      %1599 = vst.msk [vmem:[#allocation3 + $0x14] sm:$0xf] %vm1593, %v1556
      %1600 = vst.msk [vmem:[#allocation3 + $0x18] sm:$0xf] %vm1593, %v1558
      %1601 = vst.msk [vmem:[#allocation3 + $0x1c] sm:$0xf] %vm1593, %v1560
      %1602 = vst.msk [vmem:[#allocation3 + $0x20] sm:$0xf] %vm1593, %v1562
      %1603 = vst.msk [vmem:[#allocation3 + $0x24] sm:$0xf] %vm1593, %v1564
      %1604 = vst.msk [vmem:[#allocation3 + $0x28] sm:$0xf] %vm1593, %v1566
      %1605 = vst.msk [vmem:[#allocation3 + $0x2c] sm:$0xf] %vm1593, %v1568
      %1606 = vst.msk [vmem:[#allocation3 + $0x30] sm:$0xf] %vm1593, %v1570
      %1607 = vst.msk [vmem:[#allocation3 + $0x34] sm:$0xf] %vm1593, %v1572
      %1608 = vst.msk [vmem:[#allocation3 + $0x38] sm:$0xf] %vm1593, %v1574
      %1609 = vst.msk [vmem:[#allocation3 + $0x3c] sm:$0xf] %vm1593, %v1576
      %v1610 = vld [vmem:[%s183 + $0x8] sm:$0x8]
      %v1611 = vld [vmem:[%s183 + $0xc] sm:$0xf]
      %v1612 = vld [vmem:[%s183 + $0x10] sm:$0xf]
      %v1613 = vld [vmem:[%s183 + $0x14] sm:$0xf]
      %v1614 = vld [vmem:[%s183 + $0x18] sm:$0xf]
      %v1615 = vld [vmem:[%s183 + $0x1c] sm:$0xf]
      %v1616 = vld [vmem:[%s183 + $0x20] sm:$0xf]
      %v1617 = vld [vmem:[%s183 + $0x24] sm:$0xf]
      %v1618 = vld [vmem:[%s183 + $0x28] sm:$0xf]
      %v1619 = vld [vmem:[%s183 + $0x2c] sm:$0xf]
      %v1620 = vld [vmem:[%s183 + $0x30] sm:$0xf]
      %v1621 = vld [vmem:[%s183 + $0x34] sm:$0xf]
      %v1622 = vld [vmem:[%s183 + $0x38] sm:$0xf]
      %v1623 = vld [vmem:[%s183 + $0x3c] sm:$0xf]
      %v1624 = vld [vmem:[%s183 + $0x40] sm:$0xf]
      %v1625 = vld [vmem:[%s183 + $0x44] sm:$0xf]
      %v1626 = vld [vmem:[%s183 + $0x48] sm:$0x7]
      %vm1644 = vcmask 1040384
      %vm1645 = vcmask 1044484
      %vm1646 = vmor %vm1644, %vm1645
      %v1647 = vrot.slane %v1610, 7
      %v1648 = vrot.slane %v1647, 4
      %v1649 = vrot.slane %v1611, 7
      %v1650 = vsel %vm1646, %v1648, %v1649
      %v1651 = vrot.slane %v1649, 4
      %v1652 = vrot.slane %v1612, 7
      %v1653 = vsel %vm1646, %v1651, %v1652
      %v1654 = vrot.slane %v1652, 4
      %v1655 = vrot.slane %v1613, 7
      %v1656 = vsel %vm1646, %v1654, %v1655
      %v1657 = vrot.slane %v1655, 4
      %v1658 = vrot.slane %v1614, 7
      %v1659 = vsel %vm1646, %v1657, %v1658
      %v1660 = vrot.slane %v1658, 4
      %v1661 = vrot.slane %v1615, 7
      %v1662 = vsel %vm1646, %v1660, %v1661
      %v1663 = vrot.slane %v1661, 4
      %v1664 = vrot.slane %v1616, 7
      %v1665 = vsel %vm1646, %v1663, %v1664
      %v1666 = vrot.slane %v1664, 4
      %v1667 = vrot.slane %v1617, 7
      %v1668 = vsel %vm1646, %v1666, %v1667
      %v1669 = vrot.slane %v1667, 4
      %v1670 = vrot.slane %v1618, 7
      %v1671 = vsel %vm1646, %v1669, %v1670
      %v1672 = vrot.slane %v1670, 4
      %v1673 = vrot.slane %v1619, 7
      %v1674 = vsel %vm1646, %v1672, %v1673
      %v1675 = vrot.slane %v1673, 4
      %v1676 = vrot.slane %v1620, 7
      %v1677 = vsel %vm1646, %v1675, %v1676
      %v1678 = vrot.slane %v1676, 4
      %v1679 = vrot.slane %v1621, 7
      %v1680 = vsel %vm1646, %v1678, %v1679
      %v1681 = vrot.slane %v1679, 4
      %v1682 = vrot.slane %v1622, 7
      %v1683 = vsel %vm1646, %v1681, %v1682
      %v1684 = vrot.slane %v1682, 4
      %v1685 = vrot.slane %v1623, 7
      %v1686 = vsel %vm1646, %v1684, %v1685
      %v1687 = vrot.slane %v1685, 4
      %v1688 = vrot.slane %v1624, 7
      %v1689 = vsel %vm1646, %v1687, %v1688
      %v1690 = vrot.slane %v1688, 4
      %v1691 = vrot.slane %v1625, 7
      %v1692 = vsel %vm1646, %v1690, %v1691
      %v1693 = vrot.slane %v1691, 4
      %v1694 = vrot.slane %v1626, 7
      %v1695 = vsel %vm1646, %v1693, %v1694
      %1696 = vrot.lane.b32.xlu0 %v1650, 32
      %v1697 = vpop.permute.xlu0 %1696
      %1698 = vrot.lane.b32.xlu0 %v1653, 32
      %v1699 = vpop.permute.xlu0 %1698
      %1700 = vrot.lane.b32.xlu0 %v1656, 32
      %v1701 = vpop.permute.xlu0 %1700
      %1702 = vrot.lane.b32.xlu0 %v1659, 32
      %v1703 = vpop.permute.xlu0 %1702
      %1704 = vrot.lane.b32.xlu0 %v1662, 32
      %v1705 = vpop.permute.xlu0 %1704
      %1706 = vrot.lane.b32.xlu0 %v1665, 32
      %v1707 = vpop.permute.xlu0 %1706
      %1708 = vrot.lane.b32.xlu0 %v1668, 32
      %v1709 = vpop.permute.xlu0 %1708
      %1710 = vrot.lane.b32.xlu0 %v1671, 32
      %v1711 = vpop.permute.xlu0 %1710
      %1712 = vrot.lane.b32.xlu0 %v1674, 32
      %v1713 = vpop.permute.xlu0 %1712
      %1714 = vrot.lane.b32.xlu0 %v1677, 32
      %v1715 = vpop.permute.xlu0 %1714
      %1716 = vrot.lane.b32.xlu0 %v1680, 32
      %v1717 = vpop.permute.xlu0 %1716
      %1718 = vrot.lane.b32.xlu0 %v1683, 32
      %v1719 = vpop.permute.xlu0 %1718
      %1720 = vrot.lane.b32.xlu0 %v1686, 32
      %v1721 = vpop.permute.xlu0 %1720
      %1722 = vrot.lane.b32.xlu0 %v1689, 32
      %v1723 = vpop.permute.xlu0 %1722
      %1724 = vrot.lane.b32.xlu0 %v1692, 32
      %v1725 = vpop.permute.xlu0 %1724
      %1726 = vrot.lane.b32.xlu0 %v1695, 32
      %v1727 = vpop.permute.xlu0 %1726
      %vm1744 = vcmask 290048
      %1745 = vst.msk [vmem:[#allocation3] sm:$0xf] %vm1744, %v1697
      %1746 = vst.msk [vmem:[#allocation3 + $0x4] sm:$0xf] %vm1744, %v1699
      %1747 = vst.msk [vmem:[#allocation3 + $0x8] sm:$0xf] %vm1744, %v1701
      %1748 = vst.msk [vmem:[#allocation3 + $0xc] sm:$0xf] %vm1744, %v1703
      %1749 = vst.msk [vmem:[#allocation3 + $0x10] sm:$0xf] %vm1744, %v1705
      %1750 = vst.msk [vmem:[#allocation3 + $0x14] sm:$0xf] %vm1744, %v1707
      %1751 = vst.msk [vmem:[#allocation3 + $0x18] sm:$0xf] %vm1744, %v1709
      %1752 = vst.msk [vmem:[#allocation3 + $0x1c] sm:$0xf] %vm1744, %v1711
      %1753 = vst.msk [vmem:[#allocation3 + $0x20] sm:$0xf] %vm1744, %v1713
      %1754 = vst.msk [vmem:[#allocation3 + $0x24] sm:$0xf] %vm1744, %v1715
      %1755 = vst.msk [vmem:[#allocation3 + $0x28] sm:$0xf] %vm1744, %v1717
      %1756 = vst.msk [vmem:[#allocation3 + $0x2c] sm:$0xf] %vm1744, %v1719
      %1757 = vst.msk [vmem:[#allocation3 + $0x30] sm:$0xf] %vm1744, %v1721
      %1758 = vst.msk [vmem:[#allocation3 + $0x34] sm:$0xf] %vm1744, %v1723
      %1759 = vst.msk [vmem:[#allocation3 + $0x38] sm:$0xf] %vm1744, %v1725
      %1760 = vst.msk [vmem:[#allocation3 + $0x3c] sm:$0xf] %vm1744, %v1727
      %v1761 = vld [vmem:[#allocation2] sm:$0xff]
      %v1762 = vld [vmem:[#allocation2 + $0x8] sm:$0xff]
      %v1763 = vld [vmem:[#allocation2 + $0x10] sm:$0xff]
      %v1764 = vld [vmem:[#allocation2 + $0x18] sm:$0xff]
      %v1765 = vld [vmem:[#allocation2 + $0x20] sm:$0xff]
      %v1766 = vld [vmem:[#allocation2 + $0x28] sm:$0xff]
      %v1767 = vld [vmem:[#allocation2 + $0x30] sm:$0xff]
      %v1768 = vld [vmem:[#allocation2 + $0x38] sm:$0xff]
      %v1769 = vld [vmem:[#allocation2 + $0x40] sm:$0xff]
      %v1770 = vld [vmem:[#allocation2 + $0x48] sm:$0xff]
      %v1771 = vld [vmem:[#allocation2 + $0x50] sm:$0xff]
      %v1772 = vld [vmem:[#allocation2 + $0x58] sm:$0xff]
      %v1773 = vld [vmem:[#allocation2 + $0x60] sm:$0xff]
      %v1774 = vld [vmem:[#allocation2 + $0x68] sm:$0xff]
      %v1775 = vld [vmem:[#allocation2 + $0x70] sm:$0xff]
      %v1776 = vld [vmem:[#allocation2 + $0x78] sm:$0xff]
      %v1777 = vld [vmem:[#allocation3] sm:$0xf]
      %v1778 = vld [vmem:[#allocation3 + $0x4] sm:$0xf]
      %v1779 = vld [vmem:[#allocation3 + $0x8] sm:$0xf]
      %v1780 = vld [vmem:[#allocation3 + $0xc] sm:$0xf]
      %v1781 = vld [vmem:[#allocation3 + $0x10] sm:$0xf]
      %v1782 = vld [vmem:[#allocation3 + $0x14] sm:$0xf]
      %v1783 = vld [vmem:[#allocation3 + $0x18] sm:$0xf]
      %v1784 = vld [vmem:[#allocation3 + $0x1c] sm:$0xf]
      %v1785 = vld [vmem:[#allocation3 + $0x20] sm:$0xf]
      %v1786 = vld [vmem:[#allocation3 + $0x24] sm:$0xf]
      %v1787 = vld [vmem:[#allocation3 + $0x28] sm:$0xf]
      %v1788 = vld [vmem:[#allocation3 + $0x2c] sm:$0xf]
      %v1789 = vld [vmem:[#allocation3 + $0x30] sm:$0xf]
      %v1790 = vld [vmem:[#allocation3 + $0x34] sm:$0xf]
      %v1791 = vld [vmem:[#allocation3 + $0x38] sm:$0xf]
      %v1792 = vld [vmem:[#allocation3 + $0x3c] sm:$0xf]
      %v1809 = vunpack.c.l.b16 %v1777
      %v1810 = vunpack.c.l.b16 %v1778
      %v1811 = vunpack.c.l.b16 %v1779
      %v1812 = vunpack.c.l.b16 %v1780
      %v1813 = vunpack.c.l.b16 %v1781
      %v1814 = vunpack.c.l.b16 %v1782
      %v1815 = vunpack.c.l.b16 %v1783
      %v1816 = vunpack.c.l.b16 %v1784
      %v1817 = vunpack.c.l.b16 %v1785
      %v1818 = vunpack.c.l.b16 %v1786
      %v1819 = vunpack.c.l.b16 %v1787
      %v1820 = vunpack.c.l.b16 %v1788
      %v1821 = vunpack.c.l.b16 %v1789
      %v1822 = vunpack.c.l.b16 %v1790
      %v1823 = vunpack.c.l.b16 %v1791
      %v1824 = vunpack.c.l.b16 %v1792
      %v1825 = vpack.c.b16 %v1810, %v1809
      %v1826 = vpack.c.b16 %v1812, %v1811
      %v1827 = vpack.c.b16 %v1814, %v1813
      %v1828 = vpack.c.b16 %v1816, %v1815
      %v1829 = vpack.c.b16 %v1818, %v1817
      %v1830 = vpack.c.b16 %v1820, %v1819
      %v1831 = vpack.c.b16 %v1822, %v1821
      %v1832 = vpack.c.b16 %v1824, %v1823
      %v1838 = vunpack.c.l.b16 %v219
      %v1839 = vunpack.c.l.b16 %v220
      %v1840 = vunpack.c.l.b16 %v221
      %v1841 = vunpack.c.l.b16 %v222
      %v1842 = vunpack.c.l.b16 %v223
      %v1843 = vpack.c.b16 %v1839, %v1838
      %v1844 = vpack.c.b16 %v1841, %v1840
      %v1845 = vpack.c.b16 %v1842, %v1842
      %vm1848 = vcmask 293888
      %v1850 = vsel %vm1848, %v1825, 0
      %v1853 = vsel %vm1848, %v1826, 0
      %v1856 = vsel %vm1848, %v1827, 0
      %v1859 = vsel %vm1848, %v1828, 0
      %v1862 = vsel %vm1848, %v1829, 0
      %v1865 = vsel %vm1848, %v1830, 0
      %v1868 = vsel %vm1848, %v1831, 0
      %v1871 = vsel %vm1848, %v1832, 0
      %vm1873 = vcmask 1041408
      %v1875 = vsel %vm1873, %v1845, 0
      %1877 = vmatprep.subr.bf16.mxu0 0
      %1878 = vmatpush1.bf16.msra.mxu0 0
      %1879 = vmatprep.subr.bf16.mxu0 0
      %1880 = vmatpush1.bf16.msra.mxu0 0
      %1881 = vmatprep.subr.bf16.mxu0 0
      %1882 = vmatpush1.bf16.msra.mxu0 0
      %1883 = vmatprep.subr.bf16.mxu0 0
      %1884 = vmatpush1.bf16.msra.mxu0 0
      %1885 = vmatprep.subr.bf16.mxu0 0
      %1886 = vmatpush1.bf16.msra.mxu0 0
      %1887 = vmatprep.subr.bf16.mxu0 0
      %1888 = vmatpush1.bf16.msra.mxu0 %v1875
      %1889 = vmatprep.subr.bf16.mxu0 0
      %1890 = vmatpush1.bf16.msra.mxu0 %v1844
      %1891 = vmatprep.subr.bf16.mxu0 0
      %1892 = vmatpush1.bf16.msra.mxu0 %v1843
      %1893 = vmatprep.subr.bf16.mxu0 0
      %1894 = vmatpush2.bf16.msra.mxu0 0
      %1895 = vmatprep.subr.bf16.mxu0 0
      %1896 = vmatpush2.bf16.msra.mxu0 0
      %1897 = vmatprep.subr.bf16.mxu0 0
      %1898 = vmatpush2.bf16.msra.mxu0 0
      %1899 = vmatprep.subr.bf16.mxu0 0
      %1900 = vmatpush2.bf16.msra.mxu0 0
      %1901 = vmatprep.subr.bf16.mxu0 0
      %1902 = vmatpush2.bf16.msra.mxu0 0
      %1903 = vmatprep.subr.bf16.mxu0 0
      %1904 = vmatpush2.bf16.msra.mxu0 0
      %1905 = vmatprep.subr.bf16.mxu0 0
      %1906 = vmatpush2.bf16.msra.mxu0 0
      %1907 = vmatprep.subr.bf16.mxu0 0
      %1908 = vmatpush2.bf16.msra.mxu0 0
      %1909 = vmatprep.mubr.bf16.mxu0 0
      %1910 = vmatmul.mubr.bf16.gmra.mxu0 %v1850
      %v1911 = vpop.f32.mrf.mxu0
      %v1912 = vadd.f32 0.0, %v1911
      %v1913 = vpop.f32.mrf.mxu0
      %v1914 = vpop.f32.mrf.mxu0
      %v1915 = vadd.f32 0.0, %v1914
      %v1916 = vpop.f32.mrf.mxu0
      %1917 = vmatprep.mubr.bf16.mxu0 0
      %1918 = vmatmul.mubr.bf16.gmra.mxu0 %v1853
      %v1919 = vpop.f32.mrf.mxu0
      %v1920 = vadd.f32 0.0, %v1919
      %v1921 = vpop.f32.mrf.mxu0
      %v1922 = vpop.f32.mrf.mxu0
      %v1923 = vadd.f32 0.0, %v1922
      %v1924 = vpop.f32.mrf.mxu0
      %1925 = vmatprep.mubr.bf16.mxu0 0
      %1926 = vmatmul.mubr.bf16.gmra.mxu0 %v1856
      %v1927 = vpop.f32.mrf.mxu0
      %v1928 = vadd.f32 0.0, %v1927
      %v1929 = vpop.f32.mrf.mxu0
      %v1930 = vpop.f32.mrf.mxu0
      %v1931 = vadd.f32 0.0, %v1930
      %v1932 = vpop.f32.mrf.mxu0
      %1933 = vmatprep.mubr.bf16.mxu0 0
      %1934 = vmatmul.mubr.bf16.gmra.mxu0 %v1859
      %v1935 = vpop.f32.mrf.mxu0
      %v1936 = vadd.f32 0.0, %v1935
      %v1937 = vpop.f32.mrf.mxu0
      %v1938 = vpop.f32.mrf.mxu0
      %v1939 = vadd.f32 0.0, %v1938
      %v1940 = vpop.f32.mrf.mxu0
      %1941 = vmatprep.mubr.bf16.mxu0 0
      %1942 = vmatmul.mubr.bf16.gmra.mxu0 %v1862
      %v1943 = vpop.f32.mrf.mxu0
      %v1944 = vadd.f32 0.0, %v1943
      %v1945 = vpop.f32.mrf.mxu0
      %v1946 = vpop.f32.mrf.mxu0
      %v1947 = vadd.f32 0.0, %v1946
      %v1948 = vpop.f32.mrf.mxu0
      %1949 = vmatprep.mubr.bf16.mxu0 0
      %1950 = vmatmul.mubr.bf16.gmra.mxu0 %v1865
      %v1951 = vpop.f32.mrf.mxu0
      %v1952 = vadd.f32 0.0, %v1951
      %v1953 = vpop.f32.mrf.mxu0
      %v1954 = vpop.f32.mrf.mxu0
      %v1955 = vadd.f32 0.0, %v1954
      %v1956 = vpop.f32.mrf.mxu0
      %1957 = vmatprep.mubr.bf16.mxu0 0
      %1958 = vmatmul.mubr.bf16.gmra.mxu0 %v1868
      %v1959 = vpop.f32.mrf.mxu0
      %v1960 = vadd.f32 0.0, %v1959
      %v1961 = vpop.f32.mrf.mxu0
      %v1962 = vpop.f32.mrf.mxu0
      %v1963 = vadd.f32 0.0, %v1962
      %v1964 = vpop.f32.mrf.mxu0
      %1965 = vmatprep.mubr.bf16.mxu0 0
      %1966 = vmatmul.mubr.bf16.gmra.mxu0 %v1871
      %v1967 = vpop.f32.mrf.mxu0
      %v1968 = vadd.f32 0.0, %v1967
      %v1969 = vpop.f32.mrf.mxu0
      %v1970 = vpop.f32.mrf.mxu0
      %v1971 = vadd.f32 0.0, %v1970
      %v1972 = vpop.f32.mrf.mxu0
      %1973 = vdwg.mxu0
      %v1974 = vadd.f32 %v1761, %v1912
      %v1975 = vadd.f32 %v1762, %v1915
      %v1976 = vadd.f32 %v1763, %v1920
      %v1977 = vadd.f32 %v1764, %v1923
      %v1978 = vadd.f32 %v1765, %v1928
      %v1979 = vadd.f32 %v1766, %v1931
      %v1980 = vadd.f32 %v1767, %v1936
      %v1981 = vadd.f32 %v1768, %v1939
      %v1982 = vadd.f32 %v1769, %v1944
      %v1983 = vadd.f32 %v1770, %v1947
      %v1984 = vadd.f32 %v1771, %v1952
      %v1985 = vadd.f32 %v1772, %v1955
      %v1986 = vadd.f32 %v1773, %v1960
      %v1987 = vadd.f32 %v1774, %v1963
      %v1988 = vadd.f32 %v1775, %v1968
      %v1989 = vadd.f32 %v1776, %v1971
      %vm1990 = vcmask 130048
      %1991 = vst.msk [vmem:[#allocation2] sm:$0xff] %vm1990, %v1974
      %1992 = vst.msk [vmem:[#allocation2 + $0x8] sm:$0xff] %vm1990, %v1975
      %1993 = vst.msk [vmem:[#allocation2 + $0x10] sm:$0xff] %vm1990, %v1976
      %1994 = vst.msk [vmem:[#allocation2 + $0x18] sm:$0xff] %vm1990, %v1977
      %1995 = vst.msk [vmem:[#allocation2 + $0x20] sm:$0xff] %vm1990, %v1978
      %1996 = vst.msk [vmem:[#allocation2 + $0x28] sm:$0xff] %vm1990, %v1979
      %1997 = vst.msk [vmem:[#allocation2 + $0x30] sm:$0xff] %vm1990, %v1980
      %1998 = vst.msk [vmem:[#allocation2 + $0x38] sm:$0xff] %vm1990, %v1981
      %1999 = vst.msk [vmem:[#allocation2 + $0x40] sm:$0xff] %vm1990, %v1982
      %2000 = vst.msk [vmem:[#allocation2 + $0x48] sm:$0xff] %vm1990, %v1983
      %2001 = vst.msk [vmem:[#allocation2 + $0x50] sm:$0xff] %vm1990, %v1984
      %2002 = vst.msk [vmem:[#allocation2 + $0x58] sm:$0xff] %vm1990, %v1985
      %2003 = vst.msk [vmem:[#allocation2 + $0x60] sm:$0xff] %vm1990, %v1986
      %2004 = vst.msk [vmem:[#allocation2 + $0x68] sm:$0xff] %vm1990, %v1987
      %2005 = vst.msk [vmem:[#allocation2 + $0x70] sm:$0xff] %vm1990, %v1988
      %2006 = vst.msk [vmem:[#allocation2 + $0x78] sm:$0xff] %vm1990, %v1989
      %p2007 = scmp.eq.s32.totalorder %s20, 2
      // Predicated region
      $region33: #{symmetric_conv3d.1} parent=27 // pred_check
        %p2008 = pneg %p2007
      $region34: #{symmetric_conv3d.1} parent=27 // pred_check_branch
        %2010 = sbr.rel (%p2008) target = $region36
      $region35: #{symmetric_conv3d.1} parent=27 // pred_region
        %v2011 = vld [vmem:[#allocation2] sm:$0xff]
        %v2012 = vld [vmem:[#allocation2 + $0x8] sm:$0xff]
        %2013 = vst.msk [vmem:[%s193] sm:$0xff] %vm1990, %v2011
        %2014 = vst.msk [vmem:[%s193 + $0x8] sm:$0xff] %vm1990, %v2012
        %v2015 = vld [vmem:[#allocation2 + $0x10] sm:$0xff]
        %v2016 = vld [vmem:[#allocation2 + $0x18] sm:$0xff]
        %2019 = vrot.lane.b32.xlu0 %v2015, 16
        %v2020 = vpop.permute.xlu0 %2019
        %2021 = vrot.lane.b32.xlu0 %v2016, 16
        %v2022 = vpop.permute.xlu0 %2021
        %vm2025 = vcmask 261248
        %2026 = vst.msk [vmem:[%s193] sm:$0xff] %vm2025, %v2020
        %2027 = vst.msk [vmem:[%s193 + $0x8] sm:$0xff] %vm2025, %v2022
        %v2028 = vld [vmem:[#allocation2 + $0x20] sm:$0xff]
        %v2029 = vld [vmem:[#allocation2 + $0x28] sm:$0xff]
        %2032 = vrot.lane.b32.xlu0 %v2028, 32
        %v2033 = vpop.permute.xlu0 %2032
        %2034 = vrot.lane.b32.xlu0 %v2029, 32
        %v2035 = vpop.permute.xlu0 %2034
        %vm2038 = vcmask 392448
        %2039 = vst.msk [vmem:[%s193] sm:$0xff] %vm2038, %v2033
        %2040 = vst.msk [vmem:[%s193 + $0x8] sm:$0xff] %vm2038, %v2035
        %v2041 = vld [vmem:[#allocation2 + $0x30] sm:$0xff]
        %v2042 = vld [vmem:[#allocation2 + $0x38] sm:$0xff]
        %2045 = vrot.lane.b32.xlu0 %v2041, 48
        %v2046 = vpop.permute.xlu0 %2045
        %2047 = vrot.lane.b32.xlu0 %v2042, 48
        %v2048 = vpop.permute.xlu0 %2047
        %vm2051 = vcmask 523648
        %2052 = vst.msk [vmem:[%s193] sm:$0xff] %vm2051, %v2046
        %2053 = vst.msk [vmem:[%s193 + $0x8] sm:$0xff] %vm2051, %v2048
        %v2054 = vld [vmem:[#allocation2 + $0x40] sm:$0xff]
        %v2055 = vld [vmem:[#allocation2 + $0x48] sm:$0xff]
        %2058 = vrot.lane.b32.xlu0 %v2054, 64
        %v2059 = vpop.permute.xlu0 %2058
        %2060 = vrot.lane.b32.xlu0 %v2055, 64
        %v2061 = vpop.permute.xlu0 %2060
        %vm2064 = vcmask 654848
        %2065 = vst.msk [vmem:[%s193] sm:$0xff] %vm2064, %v2059
        %2066 = vst.msk [vmem:[%s193 + $0x8] sm:$0xff] %vm2064, %v2061
        %v2067 = vld [vmem:[#allocation2 + $0x50] sm:$0xff]
        %v2068 = vld [vmem:[#allocation2 + $0x58] sm:$0xff]
        %2071 = vrot.lane.b32.xlu0 %v2067, 80
        %v2072 = vpop.permute.xlu0 %2071
        %2073 = vrot.lane.b32.xlu0 %v2068, 80
        %v2074 = vpop.permute.xlu0 %2073
        %vm2077 = vcmask 786048
        %2078 = vst.msk [vmem:[%s193] sm:$0xff] %vm2077, %v2072
        %2079 = vst.msk [vmem:[%s193 + $0x8] sm:$0xff] %vm2077, %v2074
        %v2080 = vld [vmem:[#allocation2 + $0x60] sm:$0xff]
        %v2081 = vld [vmem:[#allocation2 + $0x68] sm:$0xff]
        %2084 = vrot.lane.b32.xlu0 %v2080, 96
        %v2085 = vpop.permute.xlu0 %2084
        %2086 = vrot.lane.b32.xlu0 %v2081, 96
        %v2087 = vpop.permute.xlu0 %2086
        %vm2090 = vcmask 917248
        %2091 = vst.msk [vmem:[%s193] sm:$0xff] %vm2090, %v2085
        %2092 = vst.msk [vmem:[%s193 + $0x8] sm:$0xff] %vm2090, %v2087
        %v2093 = vld [vmem:[#allocation2 + $0x70] sm:$0xff]
        %v2094 = vld [vmem:[#allocation2 + $0x78] sm:$0xff]
        %2097 = vrot.lane.b32.xlu0 %v2093, 112
        %v2098 = vpop.permute.xlu0 %2097
        %2099 = vrot.lane.b32.xlu0 %v2094, 112
        %v2100 = vpop.permute.xlu0 %2099
        %vm2103 = vcmask 1048448
        %2104 = vst.msk [vmem:[%s193] sm:$0xff] %vm2103, %v2098
        %2105 = vst.msk [vmem:[%s193 + $0x8] sm:$0xff] %vm2103, %v2100
      $region36: #{symmetric_conv3d.1} parent=27 // pred_fallthru
        _
      %p2106 = scmp.lt.s32.totalorder %s18, 1
      %s2107 = scalar_select %p2106, %s18, 1
      %p2108 = scmp.lt.s32.totalorder %s19, 3
      %s2109 = scalar_select %p2108, %s19, 3
      %s2110 = smul.addr %s2109, 2
      %s2111 = smul.addr %s2107, 8
      %s2112 = sadd.s32 %s2110, %s2111
      %s2113 = smul.addr %s2112, 8
      %s2114 = scalar_lea.vmem %s2, %s2113
      // Predicated region
      $region37: #{symmetric_conv3d.1} parent=27 // pred_check
        %p2115 = pneg %p103
      $region38: #{symmetric_conv3d.1} parent=27 // pred_check_branch
        %2117 = sbr.rel (%p2115) target = $region40
      $region39: #{symmetric_conv3d.1} parent=27 // pred_region
        _
      $region40: #{symmetric_conv3d.1} parent=27 // pred_fallthru
        _
    $region28: #{symmetric_conv3d.1} parent=5 // pred_fallthru
      _
    %p2118 = scmp.le.s32.totalorder 2, %s8
    // Predicated region
    $region41: #{symmetric_conv3d.1} parent=5 // pred_check
      %p2119 = pneg %p2118
    $region42: #{symmetric_conv3d.1} parent=5 // pred_check_branch
      %2121 = sbr.rel (%p2119) target = $region44
    $region43: #{symmetric_conv3d.1} parent=5 // pred_region
      %s2122 = ssub.s32 %s8, 2
      // Predicated region
      $region45: #{symmetric_conv3d.1} parent=43 // pred_check
        %p2123 = pneg %p109
      $region46: #{symmetric_conv3d.1} parent=43 // pred_check_branch
        %2125 = sbr.rel (%p2123) target = $region48
      $region47: #{symmetric_conv3d.1} parent=43 // pred_region
        %p2126 = scmp.lt.s32.totalorder %s21, 1
        %s2127 = scalar_select %p2126, %s21, 1
        %p2128 = scmp.lt.s32.totalorder %s22, 3
        %s2129 = scalar_select %p2128, %s22, 3
        %s2130 = smul.addr %s2129, 2
        %s2131 = smul.addr %s2127, 8
        %s2132 = sadd.s32 %s2130, %s2131
        %s2133 = smul.addr %s2132, 8
        %s2134 = scalar_lea.vmem %s2, %s2133
      $region48: #{symmetric_conv3d.1} parent=43 // pred_fallthru
        _
    $region44: #{symmetric_conv3d.1} parent=5 // pred_fallthru
      _
  $region6: #{symmetric_conv3d.1} parent=0 // loop_footer
    %s12 = sadd.s32 1, %s8
  $region7: #{symmetric_conv3d.1} parent=0 // loop_footer_branch
    %7 = sbr.rel target = $region3
  $region8: #{symmetric_conv3d.1} parent=0 // loop_exit
    _

</llo_original>
